<compile_context>
chip_gen: v7x
topology: tpu7x:2x2x1
jax: 0.10.0
libtpu: 0.0.40
codegen_flags: <defaults>
</compile_context>

<pallas_src>
import functools
import math

import jax
import jax.numpy as jnp
from jax import lax
from jax.experimental import pallas as pl
from jax.experimental.pallas import tpu as pltpu

# ----------------------------- config ---------------------------------------
B, S, H, F, VOCAB = 2, 8, 32, 64, 50     # small shapes consistent with forward
NUM_LAYERS = 2
LN_EPS = 1e-12                           # BERT layer-norm epsilon


def _layer_norm(x, gamma, beta):
    mu = jnp.mean(x, axis=-1, keepdims=True)
    var = jnp.mean((x - mu) ** 2, axis=-1, keepdims=True)
    return (x - mu) * lax.rsqrt(var + LN_EPS) * gamma + beta


# ---------------- Pallas kernel: full encoder + pooling (one step) -----------
def sbert_encoder_kernel(x_ref, amask_ref, pool_ref,
                         wq_ref, bq_ref, wk_ref, bk_ref, wv_ref, bv_ref,
                         wo_ref, bo_ref, ln1g_ref, ln1b_ref,
                         w1_ref, b1_ref, w2_ref, b2_ref,
                         ln2g_ref, ln2b_ref,
                         *out_refs, emit_hidden=False):
    x = x_ref[...]                       # (B*S, H) all sequences stacked
    amask = amask_ref[...]               # (B*S, B*S) block-diag additive mask

    # NUM_LAYERS=2 -> static unroll is fine at these shapes.
    # TODO(synk): for real BERT depth/width, replace with a layer grid axis
    # (streamed bf16 weights) instead of keeping all layers VMEM-resident.
    for l in range(NUM_LAYERS):
        # 1/sqrt(H) is already folded into wq/bq at stack time.
        q = jnp.dot(x, wq_ref[l], preferred_element_type=jnp.float32) + bq_ref[l]
        k = jnp.dot(x, wk_ref[l], preferred_element_type=jnp.float32) + bk_ref[l]
        v = jnp.dot(x, wv_ref[l], preferred_element_type=jnp.float32) + bv_ref[l]

        # single attention head (head_dim == H); whole batch in one matmul via
        # the block-diagonal mask (cross-sequence entries get -10000).
        scores = lax.dot_general(q, k, (((1,), (1,)), ((), ())),
                                 preferred_element_type=jnp.float32)      # (BS, BS)
        scores = scores + amask
        scores = scores - jnp.max(scores, axis=-1, keepdims=True)
        p = jnp.exp(scores)
        # EUP reciprocal (approx) only for the softmax denominator
        p = p * pl.reciprocal(jnp.sum(p, axis=-1, keepdims=True), approx=True)

        ctx = jnp.dot(p, v, preferred_element_type=jnp.float32)           # (BS, H)
        attn = jnp.dot(ctx, wo_ref[l],
                       preferred_element_type=jnp.float32) + bo_ref[l]
        h1 = _layer_norm(x + attn, ln1g_ref[l], ln1b_ref[l])

        ff = jnp.dot(h1, w1_ref[l], preferred_element_type=jnp.float32) + b1_ref[l]
        ff = jax.nn.gelu(ff)
        ff = jnp.dot(ff, w2_ref[l], preferred_element_type=jnp.float32) + b2_ref[l]
        x = _layer_norm(h1 + ff, ln2g_ref[l], ln2b_ref[l])

    # Pooling as a lane-dense (B, B*S) @ (B*S, H) MXU matmul.
    wm = pool_ref[0]                     # (B, B*S) idf*mask / mask / one-hot rows
    m = pool_ref[1]                      # (B, B*S) mask rows -> denominator
    num = jnp.dot(wm, x, preferred_element_type=jnp.float32)              # (B, H)
    den = jnp.maximum(jnp.sum(m, axis=-1, keepdims=True), 1e-9)           # (B, 1)
    out_refs[0][...] = num / den         # exact divide (correctness feedback)

    if emit_hidden:                      # only needed for 'max' pooling
        out_refs[1][...] = x             # (B*S, H)


_WEIGHT_NAMES = ('wq', 'bq', 'wk', 'bk', 'wv', 'bv', 'wo', 'bo',
                 'ln1_g', 'ln1_b', 'w1', 'b1', 'w2', 'b2', 'ln2_g', 'ln2_b')


def _vmem_spec():
    # Whole array resident in VMEM, no pipelining / double-buffering.
    return pl.BlockSpec(memory_space=pltpu.MemorySpace.VMEM)


def sbert_encode_pool(x0, amask, pool_pack, stacked, *, emit_hidden=False):
    """One grid-less pallas_call: all transformer layers + pooling."""
    weights = [stacked[n] for n in _WEIGHT_NAMES]
    n_in = 3 + len(weights)

    if emit_hidden:
        out_shape = (jax.ShapeDtypeStruct((B, H), jnp.float32),
                     jax.ShapeDtypeStruct((B * S, H), jnp.float32))
        out_specs = (_vmem_spec(), _vmem_spec())
    else:
        out_shape = jax.ShapeDtypeStruct((B, H), jnp.float32)
        out_specs = _vmem_spec()

    return pl.pallas_call(
        functools.partial(sbert_encoder_kernel, emit_hidden=emit_hidden),
        out_shape=out_shape,
        in_specs=[_vmem_spec() for _ in range(n_in)],
        out_specs=out_specs,
    )(x0, amask, pool_pack, *weights)


# ------------------------------ glue / model --------------------------------
def init_params(key):
    std = 0.02
    keys = jax.random.split(key, 3 + NUM_LAYERS)
    params = {
        'word_emb': jax.random.normal(keys[0], (VOCAB, H)) * std,
        'pos_emb': jax.random.normal(keys[1], (S, H)) * std,
        'type_emb': jax.random.normal(keys[2], (2, H)) * std,
        'emb_ln_g': jnp.ones((1, H), jnp.float32),
        'emb_ln_b': jnp.zeros((1, H), jnp.float32),
        'layers': [],
    }
    for l in range(NUM_LAYERS):
        lk = jax.random.split(keys[3 + l], 6)
        params['layers'].append({
            'wq': jax.random.normal(lk[0], (H, H)) * std, 'bq': jnp.zeros((1, H)),
            'wk': jax.random.normal(lk[1], (H, H)) * std, 'bk': jnp.zeros((1, H)),
            'wv': jax.random.normal(lk[2], (H, H)) * std, 'bv': jnp.zeros((1, H)),
            'wo': jax.random.normal(lk[3], (H, H)) * std, 'bo': jnp.zeros((1, H)),
            'ln1_g': jnp.ones((1, H)), 'ln1_b': jnp.zeros((1, H)),
            'w1': jax.random.normal(lk[4], (H, F)) * std, 'b1': jnp.zeros((1, F)),
            'w2': jax.random.normal(lk[5], (F, H)) * std, 'b2': jnp.zeros((1, H)),
            'ln2_g': jnp.ones((1, H)), 'ln2_b': jnp.zeros((1, H)),
        })
    return params


def stack_layer_params(layers):
    """Stack per-layer weights along a leading L axis; fold 1/sqrt(H) into wq/bq."""
    inv_sqrt_h = 1.0 / math.sqrt(H)

    def st(fn):
        return jnp.stack([fn(lp) for lp in layers], axis=0)

    return {
        'wq': st(lambda lp: lp['wq'] * inv_sqrt_h),
        'bq': st(lambda lp: lp['bq'] * inv_sqrt_h),
        'wk': st(lambda lp: lp['wk']), 'bk': st(lambda lp: lp['bk']),
        'wv': st(lambda lp: lp['wv']), 'bv': st(lambda lp: lp['bv']),
        'wo': st(lambda lp: lp['wo']), 'bo': st(lambda lp: lp['bo']),
        'ln1_g': st(lambda lp: lp['ln1_g']), 'ln1_b': st(lambda lp: lp['ln1_b']),
        'w1': st(lambda lp: lp['w1']), 'b1': st(lambda lp: lp['b1']),
        'w2': st(lambda lp: lp['w2']), 'b2': st(lambda lp: lp['b2']),
        'ln2_g': st(lambda lp: lp['ln2_g']), 'ln2_b': st(lambda lp: lp['ln2_b']),
    }


def build_idf_table(idf_dict):
    # idf_weight = log2(719 / (1 + idf[tok])) if tok in dict else log2(719)
    table = [math.log(719 / (1 + idf_dict[t]), 2) if t in idf_dict
             else math.log(719 / 1, 2) for t in range(VOCAB)]
    return jnp.asarray(table, dtype=jnp.float32)


def sbert_forward(in1, in1m, params, stacked, idf_table, pooling='idf'):
    mask_f = in1m.astype(jnp.float32)                         # (B, S)

    # embeddings (gather) + embedding layer-norm in plain-JAX glue
    x0 = (params['word_emb'][in1]
          + params['pos_emb'][None, :, :]
          + params['type_emb'][0][None, None, :])             # token_type_ids=None -> 0
    x0 = _layer_norm(x0, params['emb_ln_g'], params['emb_ln_b'])
    x0 = x0.reshape(B * S, H)

    # Block-diagonal additive attention mask over the flattened (B*S) tokens:
    # query i attends key j iff same sequence AND key j is unpadded.
    seq_id = jnp.arange(B * S) // S
    same_seq = (seq_id[:, None] == seq_id[None, :]).astype(jnp.float32)
    key_ok = mask_f.reshape(1, B * S)
    amask = (1.0 - same_seq * key_ok) * -10000.0              # (B*S, B*S)

    # Pooling numerator/denominator rows (per sequence), later placed block-diag.
    if pooling == 'idf':
        token_w = jnp.take(idf_table, in1) * mask_f           # per-token idf * mask
        m_rows = mask_f
    elif pooling == 'avg':
        token_w = mask_f
        m_rows = mask_f
    elif pooling == 'cls':
        sel = (jnp.arange(S) == 0).astype(jnp.float32)        # select token 0
        token_w = jnp.broadcast_to(sel[None, :], (B, S))
        m_rows = token_w                                      # denominator = 1
    elif pooling == 'max':
        token_w = mask_f                                      # pooled output unused
        m_rows = mask_f
    else:
        raise ValueError(pooling)

    eye_b = jnp.eye(B, dtype=jnp.float32)
    wm = (eye_b[:, :, None] * token_w[None, :, :]).reshape(B, B * S)
    mr = (eye_b[:, :, None] * m_rows[None, :, :]).reshape(B, B * S)
    pool_pack = jnp.stack([wm, mr], axis=0)                   # (2, B, B*S)

    if pooling == 'max':
        # TODO(synk): if this path ever matters for perf, emit hidden lane-dense
        # as (B, S*H) from the kernel instead of (B*S, H).
        pooled, hidden = sbert_encode_pool(x0, amask, pool_pack, stacked,
                                           emit_hidden=True)
        hidden = hidden.reshape(B, S, H)
        return jnp.max(jnp.where(mask_f[..., None] == 0, -1e9, hidden), axis=1)

    pooled = sbert_encode_pool(x0, amask, pool_pack, stacked)
    return pooled


# ----------------------------- pure-JAX reference ---------------------------
def ref_forward(in1, in1m, params, idf_table):
    mask_f = in1m.astype(jnp.float32)
    x = (params['word_emb'][in1] + params['pos_emb'][None]
         + params['type_emb'][0][None, None])
    x = _layer_norm(x, params['emb_ln_g'], params['emb_ln_b'])
    amask = (1.0 - mask_f) * -10000.0
    for lp in params['layers']:
        q = x @ lp['wq'] + lp['bq']
        k = x @ lp['wk'] + lp['bk']
        v = x @ lp['wv'] + lp['bv']
        s = jnp.einsum('bsh,bth->bst', q, k) / math.sqrt(H) + amask[:, None, :]
        p = jax.nn.softmax(s, axis=-1)
        attn = jnp.einsum('bst,bth->bsh', p, v) @ lp['wo'] + lp['bo']
        h1 = _layer_norm(x + attn, lp['ln1_g'], lp['ln1_b'])
        ff = jax.nn.gelu(h1 @ lp['w1'] + lp['b1']) @ lp['w2'] + lp['b2']
        x = _layer_norm(h1 + ff, lp['ln2_g'], lp['ln2_b'])
    token_w = jnp.take(idf_table, in1) * mask_f
    num = jnp.sum(x * token_w[..., None], axis=1)
    den = jnp.clip(jnp.sum(mask_f, axis=1, keepdims=True), 1e-9)
    return num / den


# --------------------------------- main --------------------------------------
if __name__ == "__main__":
    key = jax.random.PRNGKey(0)
    pkey, ikey = jax.random.split(key)
    params = init_params(pkey)
    stacked = stack_layer_params(params['layers'])

    # synthetic idf dictionary (token id -> document frequency)
    idf_dict = {t: (t % 7) + 1 for t in range(0, VOCAB, 3)}
    idf_table = build_idf_table(idf_dict)

    in1 = jax.random.randint(ikey, (B, S), 0, VOCAB, dtype=jnp.int32)
    lens = jnp.array([6, 4], dtype=jnp.int32)
    in1m = (jnp.arange(S)[None, :] < lens[:, None]).astype(jnp.int32)

    out = sbert_forward(in1, in1m, params, stacked, idf_table, pooling='idf')
    out = jax.block_until_ready(out)

    ref = jax.block_until_ready(ref_forward(in1, in1m, params, idf_table))
    assert out.shape == (B, H) and out.dtype == jnp.float32
    assert bool(jnp.all(jnp.isfinite(out)))
    # softmax denominator still uses the approx EUP reciprocal (pooled divide is
    # now exact), so keep a modest tolerance
    assert bool(jnp.allclose(out, ref, rtol=2e-3, atol=2e-3)), "mismatch vs reference"

    print("KERNEL_OK")
</pallas_src>

<mosaic_0001>
module attributes {stable_mosaic.version = 11 : i64} {
  func.func @sbert_encoder_kernel(%arg0: memref<16x32xf32, #tpu.memory_space<vmem>>, %arg1: memref<16x16xf32, #tpu.memory_space<vmem>>, %arg2: memref<2x2x16xf32, #tpu.memory_space<vmem>>, %arg3: memref<2x32x32xf32, #tpu.memory_space<vmem>>, %arg4: memref<2x1x32xf32, #tpu.memory_space<vmem>>, %arg5: memref<2x32x32xf32, #tpu.memory_space<vmem>>, %arg6: memref<2x1x32xf32, #tpu.memory_space<vmem>>, %arg7: memref<2x32x32xf32, #tpu.memory_space<vmem>>, %arg8: memref<2x1x32xf32, #tpu.memory_space<vmem>>, %arg9: memref<2x32x32xf32, #tpu.memory_space<vmem>>, %arg10: memref<2x1x32xf32, #tpu.memory_space<vmem>>, %arg11: memref<2x1x32xf32, #tpu.memory_space<vmem>>, %arg12: memref<2x1x32xf32, #tpu.memory_space<vmem>>, %arg13: memref<2x32x64xf32, #tpu.memory_space<vmem>>, %arg14: memref<2x1x64xf32, #tpu.memory_space<vmem>>, %arg15: memref<2x64x32xf32, #tpu.memory_space<vmem>>, %arg16: memref<2x1x32xf32, #tpu.memory_space<vmem>>, %arg17: memref<2x1x32xf32, #tpu.memory_space<vmem>>, %arg18: memref<2x1x32xf32, #tpu.memory_space<vmem>>, %arg19: memref<2x32xf32, #tpu.memory_space<vmem>>) attributes {dimension_semantics = [], scalar_prefetch = 0 : i64, scratch_operands = 0 : i64, tpu.core_type = #tpu.core_type<tc>} {
    %c0 = arith.constant 0 : index
    %c0_0 = arith.constant 0 : index
    %0 = vector.load %arg0[%c0, %c0_0] : memref<16x32xf32, #tpu.memory_space<vmem>>, vector<16x32xf32>
    %c0_1 = arith.constant 0 : index
    %c0_2 = arith.constant 0 : index
    %1 = vector.load %arg1[%c0_1, %c0_2] : memref<16x16xf32, #tpu.memory_space<vmem>>, vector<16x16xf32>
    %c0_3 = arith.constant 0 : index
    %c0_4 = arith.constant 0 : index
    %c0_5 = arith.constant 0 : index
    %2 = vector.load %arg3[%c0_3, %c0_4, %c0_5] : memref<2x32x32xf32, #tpu.memory_space<vmem>>, vector<1x32x32xf32>
    %3 = vector.shape_cast %2 : vector<1x32x32xf32> to vector<32x32xf32>
    %cst = arith.constant dense<0.000000e+00> : vector<16x32xf32>
    %4 = tpu.matmul %0, %3, %cst {dimension_numbers = #tpu.dot_dimension_numbers<[1], [0], [0], [1], [0, 0, 1, 1], [], []>} : vector<16x32xf32>, vector<32x32xf32>, vector<16x32xf32> -> vector<16x32xf32>
    %c0_6 = arith.constant 0 : index
    %c0_7 = arith.constant 0 : index
    %c0_8 = arith.constant 0 : index
    %5 = vector.load %arg4[%c0_6, %c0_7, %c0_8] : memref<2x1x32xf32, #tpu.memory_space<vmem>>, vector<1x1x32xf32>
    %6 = vector.shape_cast %5 : vector<1x1x32xf32> to vector<1x32xf32>
    %7 = vector.broadcast %6 : vector<1x32xf32> to vector<16x32xf32>
    %8 = arith.addf %4, %7 : vector<16x32xf32>
    %c0_9 = arith.constant 0 : index
    %c0_10 = arith.constant 0 : index
    %c0_11 = arith.constant 0 : index
    %9 = vector.load %arg5[%c0_9, %c0_10, %c0_11] : memref<2x32x32xf32, #tpu.memory_space<vmem>>, vector<1x32x32xf32>
    %10 = vector.shape_cast %9 : vector<1x32x32xf32> to vector<32x32xf32>
    %cst_12 = arith.constant dense<0.000000e+00> : vector<16x32xf32>
    %11 = tpu.matmul %0, %10, %cst_12 {dimension_numbers = #tpu.dot_dimension_numbers<[1], [0], [0], [1], [0, 0, 1, 1], [], []>} : vector<16x32xf32>, vector<32x32xf32>, vector<16x32xf32> -> vector<16x32xf32>
    %c0_13 = arith.constant 0 : index
    %c0_14 = arith.constant 0 : index
    %c0_15 = arith.constant 0 : index
    %12 = vector.load %arg6[%c0_13, %c0_14, %c0_15] : memref<2x1x32xf32, #tpu.memory_space<vmem>>, vector<1x1x32xf32>
    %13 = vector.shape_cast %12 : vector<1x1x32xf32> to vector<1x32xf32>
    %14 = vector.broadcast %13 : vector<1x32xf32> to vector<16x32xf32>
    %15 = arith.addf %11, %14 : vector<16x32xf32>
    %c0_16 = arith.constant 0 : index
    %c0_17 = arith.constant 0 : index
    %c0_18 = arith.constant 0 : index
    %16 = vector.load %arg7[%c0_16, %c0_17, %c0_18] : memref<2x32x32xf32, #tpu.memory_space<vmem>>, vector<1x32x32xf32>
    %17 = vector.shape_cast %16 : vector<1x32x32xf32> to vector<32x32xf32>
    %cst_19 = arith.constant dense<0.000000e+00> : vector<16x32xf32>
    %18 = tpu.matmul %0, %17, %cst_19 {dimension_numbers = #tpu.dot_dimension_numbers<[1], [0], [0], [1], [0, 0, 1, 1], [], []>} : vector<16x32xf32>, vector<32x32xf32>, vector<16x32xf32> -> vector<16x32xf32>
    %c0_20 = arith.constant 0 : index
    %c0_21 = arith.constant 0 : index
    %c0_22 = arith.constant 0 : index
    %19 = vector.load %arg8[%c0_20, %c0_21, %c0_22] : memref<2x1x32xf32, #tpu.memory_space<vmem>>, vector<1x1x32xf32>
    %20 = vector.shape_cast %19 : vector<1x1x32xf32> to vector<1x32xf32>
    %21 = vector.broadcast %20 : vector<1x32xf32> to vector<16x32xf32>
    %22 = arith.addf %18, %21 : vector<16x32xf32>
    %cst_23 = arith.constant dense<0.000000e+00> : vector<16x16xf32>
    %23 = tpu.matmul %8, %15, %cst_23 {dimension_numbers = #tpu.dot_dimension_numbers<[1], [1], [0], [0], [0, 0, 1, 0], [], []>} : vector<16x32xf32>, vector<16x32xf32>, vector<16x16xf32> -> vector<16x16xf32>
    %24 = arith.addf %23, %1 : vector<16x16xf32>
    %cst_24 = arith.constant dense<0xFF800000> : vector<16xf32>
    %25 = vector.multi_reduction <maximumf>, %24, %cst_24 [1] : vector<16x16xf32> to vector<16xf32>
    %26 = vector.shape_cast %25 : vector<16xf32> to vector<16x1xf32>
    %27 = vector.broadcast %26 : vector<16x1xf32> to vector<16x16xf32>
    %28 = arith.subf %24, %27 : vector<16x16xf32>
    %29 = math.exp %28 : vector<16x16xf32>
    %cst_25 = arith.constant dense<0.000000e+00> : vector<16xf32>
    %30 = vector.multi_reduction <add>, %29, %cst_25 [1] : vector<16x16xf32> to vector<16xf32>
    %31 = vector.shape_cast %30 : vector<16xf32> to vector<16x1xf32>
    %32 = tpu.reciprocal %31 {approx = true} : vector<16x1xf32> -> vector<16x1xf32>
    %33 = vector.broadcast %32 : vector<16x1xf32> to vector<16x16xf32>
    %34 = arith.mulf %29, %33 : vector<16x16xf32>
    %cst_26 = arith.constant dense<0.000000e+00> : vector<16x32xf32>
    %35 = tpu.matmul %34, %22, %cst_26 {dimension_numbers = #tpu.dot_dimension_numbers<[1], [0], [0], [1], [0, 0, 1, 1], [], []>} : vector<16x16xf32>, vector<16x32xf32>, vector<16x32xf32> -> vector<16x32xf32>
    %c0_27 = arith.constant 0 : index
    %c0_28 = arith.constant 0 : index
    %c0_29 = arith.constant 0 : index
    %36 = vector.load %arg9[%c0_27, %c0_28, %c0_29] : memref<2x32x32xf32, #tpu.memory_space<vmem>>, vector<1x32x32xf32>
    %37 = vector.shape_cast %36 : vector<1x32x32xf32> to vector<32x32xf32>
    %cst_30 = arith.constant dense<0.000000e+00> : vector<16x32xf32>
    %38 = tpu.matmul %35, %37, %cst_30 {dimension_numbers = #tpu.dot_dimension_numbers<[1], [0], [0], [1], [0, 0, 1, 1], [], []>} : vector<16x32xf32>, vector<32x32xf32>, vector<16x32xf32> -> vector<16x32xf32>
    %c0_31 = arith.constant 0 : index
    %c0_32 = arith.constant 0 : index
    %c0_33 = arith.constant 0 : index
    %39 = vector.load %arg10[%c0_31, %c0_32, %c0_33] : memref<2x1x32xf32, #tpu.memory_space<vmem>>, vector<1x1x32xf32>
    %40 = vector.shape_cast %39 : vector<1x1x32xf32> to vector<1x32xf32>
    %41 = vector.broadcast %40 : vector<1x32xf32> to vector<16x32xf32>
    %42 = arith.addf %38, %41 : vector<16x32xf32>
    %43 = arith.addf %0, %42 : vector<16x32xf32>
    %c0_34 = arith.constant 0 : index
    %c0_35 = arith.constant 0 : index
    %c0_36 = arith.constant 0 : index
    %44 = vector.load %arg11[%c0_34, %c0_35, %c0_36] : memref<2x1x32xf32, #tpu.memory_space<vmem>>, vector<1x1x32xf32>
    %45 = vector.shape_cast %44 : vector<1x1x32xf32> to vector<1x32xf32>
    %c0_37 = arith.constant 0 : index
    %c0_38 = arith.constant 0 : index
    %c0_39 = arith.constant 0 : index
    %46 = vector.load %arg12[%c0_37, %c0_38, %c0_39] : memref<2x1x32xf32, #tpu.memory_space<vmem>>, vector<1x1x32xf32>
    %47 = vector.shape_cast %46 : vector<1x1x32xf32> to vector<1x32xf32>
    %cst_40 = arith.constant dense<0.000000e+00> : vector<16xf32>
    %48 = vector.multi_reduction <add>, %43, %cst_40 [1] : vector<16x32xf32> to vector<16xf32>
    %49 = vector.shape_cast %48 : vector<16xf32> to vector<16x1xf32>
    %cst_41 = arith.constant 3.200000e+01 : f32
    %50 = vector.broadcast %cst_41 : f32 to vector<16x1xf32>
    %51 = arith.divf %49, %50 : vector<16x1xf32>
    %52 = vector.broadcast %51 : vector<16x1xf32> to vector<16x32xf32>
    %53 = arith.subf %43, %52 : vector<16x32xf32>
    %54 = arith.mulf %53, %53 : vector<16x32xf32>
    %cst_42 = arith.constant dense<0.000000e+00> : vector<16xf32>
    %55 = vector.multi_reduction <add>, %54, %cst_42 [1] : vector<16x32xf32> to vector<16xf32>
    %56 = vector.shape_cast %55 : vector<16xf32> to vector<16x1xf32>
    %cst_43 = arith.constant 3.200000e+01 : f32
    %57 = vector.broadcast %cst_43 : f32 to vector<16x1xf32>
    %58 = arith.divf %56, %57 : vector<16x1xf32>
    %59 = vector.broadcast %51 : vector<16x1xf32> to vector<16x32xf32>
    %60 = arith.subf %43, %59 : vector<16x32xf32>
    %cst_44 = arith.constant 9.99999996E-13 : f32
    %61 = vector.broadcast %cst_44 : f32 to vector<16x1xf32>
    %62 = arith.addf %58, %61 : vector<16x1xf32>
    %63 = math.rsqrt %62 : vector<16x1xf32>
    %64 = vector.broadcast %63 : vector<16x1xf32> to vector<16x32xf32>
    %65 = arith.mulf %60, %64 : vector<16x32xf32>
    %66 = vector.broadcast %45 : vector<1x32xf32> to vector<16x32xf32>
    %67 = arith.mulf %65, %66 : vector<16x32xf32>
    %68 = vector.broadcast %47 : vector<1x32xf32> to vector<16x32xf32>
    %69 = arith.addf %67, %68 : vector<16x32xf32>
    %c0_45 = arith.constant 0 : index
    %c0_46 = arith.constant 0 : index
    %c0_47 = arith.constant 0 : index
    %70 = vector.load %arg13[%c0_45, %c0_46, %c0_47] : memref<2x32x64xf32, #tpu.memory_space<vmem>>, vector<1x32x64xf32>
    %71 = vector.shape_cast %70 : vector<1x32x64xf32> to vector<32x64xf32>
    %cst_48 = arith.constant dense<0.000000e+00> : vector<16x64xf32>
    %72 = tpu.matmul %69, %71, %cst_48 {dimension_numbers = #tpu.dot_dimension_numbers<[1], [0], [0], [1], [0, 0, 1, 1], [], []>} : vector<16x32xf32>, vector<32x64xf32>, vector<16x64xf32> -> vector<16x64xf32>
    %c0_49 = arith.constant 0 : index
    %c0_50 = arith.constant 0 : index
    %c0_51 = arith.constant 0 : index
    %73 = vector.load %arg14[%c0_49, %c0_50, %c0_51] : memref<2x1x64xf32, #tpu.memory_space<vmem>>, vector<1x1x64xf32>
    %74 = vector.shape_cast %73 : vector<1x1x64xf32> to vector<1x64xf32>
    %75 = vector.broadcast %74 : vector<1x64xf32> to vector<16x64xf32>
    %76 = arith.addf %72, %75 : vector<16x64xf32>
    %77 = arith.mulf %76, %76 : vector<16x64xf32>
    %78 = arith.mulf %76, %77 : vector<16x64xf32>
    %cst_52 = arith.constant 4.471500e-02 : f32
    %79 = vector.broadcast %cst_52 : f32 to vector<16x64xf32>
    %80 = arith.mulf %79, %78 : vector<16x64xf32>
    %81 = arith.addf %76, %80 : vector<16x64xf32>
    %cst_53 = arith.constant 0.797884583 : f32
    %82 = vector.broadcast %cst_53 : f32 to vector<16x64xf32>
    %83 = arith.mulf %82, %81 : vector<16x64xf32>
    %84 = math.tanh %83 : vector<16x64xf32>
    %cst_54 = arith.constant 1.000000e+00 : f32
    %85 = vector.broadcast %cst_54 : f32 to vector<16x64xf32>
    %86 = arith.addf %85, %84 : vector<16x64xf32>
    %cst_55 = arith.constant 5.000000e-01 : f32
    %87 = vector.broadcast %cst_55 : f32 to vector<16x64xf32>
    %88 = arith.mulf %87, %86 : vector<16x64xf32>
    %89 = arith.mulf %76, %88 : vector<16x64xf32>
    %c0_56 = arith.constant 0 : index
    %c0_57 = arith.constant 0 : index
    %c0_58 = arith.constant 0 : index
    %90 = vector.load %arg15[%c0_56, %c0_57, %c0_58] : memref<2x64x32xf32, #tpu.memory_space<vmem>>, vector<1x64x32xf32>
    %91 = vector.shape_cast %90 : vector<1x64x32xf32> to vector<64x32xf32>
    %cst_59 = arith.constant dense<0.000000e+00> : vector<16x32xf32>
    %92 = tpu.matmul %89, %91, %cst_59 {dimension_numbers = #tpu.dot_dimension_numbers<[1], [0], [0], [1], [0, 0, 1, 1], [], []>} : vector<16x64xf32>, vector<64x32xf32>, vector<16x32xf32> -> vector<16x32xf32>
    %c0_60 = arith.constant 0 : index
    %c0_61 = arith.constant 0 : index
    %c0_62 = arith.constant 0 : index
    %93 = vector.load %arg16[%c0_60, %c0_61, %c0_62] : memref<2x1x32xf32, #tpu.memory_space<vmem>>, vector<1x1x32xf32>
    %94 = vector.shape_cast %93 : vector<1x1x32xf32> to vector<1x32xf32>
    %95 = vector.broadcast %94 : vector<1x32xf32> to vector<16x32xf32>
    %96 = arith.addf %92, %95 : vector<16x32xf32>
    %97 = arith.addf %69, %96 : vector<16x32xf32>
    %c0_63 = arith.constant 0 : index
    %c0_64 = arith.constant 0 : index
    %c0_65 = arith.constant 0 : index
    %98 = vector.load %arg17[%c0_63, %c0_64, %c0_65] : memref<2x1x32xf32, #tpu.memory_space<vmem>>, vector<1x1x32xf32>
    %99 = vector.shape_cast %98 : vector<1x1x32xf32> to vector<1x32xf32>
    %c0_66 = arith.constant 0 : index
    %c0_67 = arith.constant 0 : index
    %c0_68 = arith.constant 0 : index
    %100 = vector.load %arg18[%c0_66, %c0_67, %c0_68] : memref<2x1x32xf32, #tpu.memory_space<vmem>>, vector<1x1x32xf32>
    %101 = vector.shape_cast %100 : vector<1x1x32xf32> to vector<1x32xf32>
    %cst_69 = arith.constant dense<0.000000e+00> : vector<16xf32>
    %102 = vector.multi_reduction <add>, %97, %cst_69 [1] : vector<16x32xf32> to vector<16xf32>
    %103 = vector.shape_cast %102 : vector<16xf32> to vector<16x1xf32>
    %cst_70 = arith.constant 3.200000e+01 : f32
    %104 = vector.broadcast %cst_70 : f32 to vector<16x1xf32>
    %105 = arith.divf %103, %104 : vector<16x1xf32>
    %106 = vector.broadcast %105 : vector<16x1xf32> to vector<16x32xf32>
    %107 = arith.subf %97, %106 : vector<16x32xf32>
    %108 = arith.mulf %107, %107 : vector<16x32xf32>
    %cst_71 = arith.constant dense<0.000000e+00> : vector<16xf32>
    %109 = vector.multi_reduction <add>, %108, %cst_71 [1] : vector<16x32xf32> to vector<16xf32>
    %110 = vector.shape_cast %109 : vector<16xf32> to vector<16x1xf32>
    %cst_72 = arith.constant 3.200000e+01 : f32
    %111 = vector.broadcast %cst_72 : f32 to vector<16x1xf32>
    %112 = arith.divf %110, %111 : vector<16x1xf32>
    %113 = vector.broadcast %105 : vector<16x1xf32> to vector<16x32xf32>
    %114 = arith.subf %97, %113 : vector<16x32xf32>
    %cst_73 = arith.constant 9.99999996E-13 : f32
    %115 = vector.broadcast %cst_73 : f32 to vector<16x1xf32>
    %116 = arith.addf %112, %115 : vector<16x1xf32>
    %117 = math.rsqrt %116 : vector<16x1xf32>
    %118 = vector.broadcast %117 : vector<16x1xf32> to vector<16x32xf32>
    %119 = arith.mulf %114, %118 : vector<16x32xf32>
    %120 = vector.broadcast %99 : vector<1x32xf32> to vector<16x32xf32>
    %121 = arith.mulf %119, %120 : vector<16x32xf32>
    %122 = vector.broadcast %101 : vector<1x32xf32> to vector<16x32xf32>
    %123 = arith.addf %121, %122 : vector<16x32xf32>
    %c1 = arith.constant 1 : index
    %c0_74 = arith.constant 0 : index
    %c0_75 = arith.constant 0 : index
    %124 = vector.load %arg3[%c1, %c0_74, %c0_75] : memref<2x32x32xf32, #tpu.memory_space<vmem>>, vector<1x32x32xf32>
    %125 = vector.shape_cast %124 : vector<1x32x32xf32> to vector<32x32xf32>
    %cst_76 = arith.constant dense<0.000000e+00> : vector<16x32xf32>
    %126 = tpu.matmul %123, %125, %cst_76 {dimension_numbers = #tpu.dot_dimension_numbers<[1], [0], [0], [1], [0, 0, 1, 1], [], []>} : vector<16x32xf32>, vector<32x32xf32>, vector<16x32xf32> -> vector<16x32xf32>
    %c1_77 = arith.constant 1 : index
    %c0_78 = arith.constant 0 : index
    %c0_79 = arith.constant 0 : index
    %127 = vector.load %arg4[%c1_77, %c0_78, %c0_79] : memref<2x1x32xf32, #tpu.memory_space<vmem>>, vector<1x1x32xf32>
    %128 = vector.shape_cast %127 : vector<1x1x32xf32> to vector<1x32xf32>
    %129 = vector.broadcast %128 : vector<1x32xf32> to vector<16x32xf32>
    %130 = arith.addf %126, %129 : vector<16x32xf32>
    %c1_80 = arith.constant 1 : index
    %c0_81 = arith.constant 0 : index
    %c0_82 = arith.constant 0 : index
    %131 = vector.load %arg5[%c1_80, %c0_81, %c0_82] : memref<2x32x32xf32, #tpu.memory_space<vmem>>, vector<1x32x32xf32>
    %132 = vector.shape_cast %131 : vector<1x32x32xf32> to vector<32x32xf32>
    %cst_83 = arith.constant dense<0.000000e+00> : vector<16x32xf32>
    %133 = tpu.matmul %123, %132, %cst_83 {dimension_numbers = #tpu.dot_dimension_numbers<[1], [0], [0], [1], [0, 0, 1, 1], [], []>} : vector<16x32xf32>, vector<32x32xf32>, vector<16x32xf32> -> vector<16x32xf32>
    %c1_84 = arith.constant 1 : index
    %c0_85 = arith.constant 0 : index
    %c0_86 = arith.constant 0 : index
    %134 = vector.load %arg6[%c1_84, %c0_85, %c0_86] : memref<2x1x32xf32, #tpu.memory_space<vmem>>, vector<1x1x32xf32>
    %135 = vector.shape_cast %134 : vector<1x1x32xf32> to vector<1x32xf32>
    %136 = vector.broadcast %135 : vector<1x32xf32> to vector<16x32xf32>
    %137 = arith.addf %133, %136 : vector<16x32xf32>
    %c1_87 = arith.constant 1 : index
    %c0_88 = arith.constant 0 : index
    %c0_89 = arith.constant 0 : index
    %138 = vector.load %arg7[%c1_87, %c0_88, %c0_89] : memref<2x32x32xf32, #tpu.memory_space<vmem>>, vector<1x32x32xf32>
    %139 = vector.shape_cast %138 : vector<1x32x32xf32> to vector<32x32xf32>
    %cst_90 = arith.constant dense<0.000000e+00> : vector<16x32xf32>
    %140 = tpu.matmul %123, %139, %cst_90 {dimension_numbers = #tpu.dot_dimension_numbers<[1], [0], [0], [1], [0, 0, 1, 1], [], []>} : vector<16x32xf32>, vector<32x32xf32>, vector<16x32xf32> -> vector<16x32xf32>
    %c1_91 = arith.constant 1 : index
    %c0_92 = arith.constant 0 : index
    %c0_93 = arith.constant 0 : index
    %141 = vector.load %arg8[%c1_91, %c0_92, %c0_93] : memref<2x1x32xf32, #tpu.memory_space<vmem>>, vector<1x1x32xf32>
    %142 = vector.shape_cast %141 : vector<1x1x32xf32> to vector<1x32xf32>
    %143 = vector.broadcast %142 : vector<1x32xf32> to vector<16x32xf32>
    %144 = arith.addf %140, %143 : vector<16x32xf32>
    %cst_94 = arith.constant dense<0.000000e+00> : vector<16x16xf32>
    %145 = tpu.matmul %130, %137, %cst_94 {dimension_numbers = #tpu.dot_dimension_numbers<[1], [1], [0], [0], [0, 0, 1, 0], [], []>} : vector<16x32xf32>, vector<16x32xf32>, vector<16x16xf32> -> vector<16x16xf32>
    %146 = arith.addf %145, %1 : vector<16x16xf32>
    %cst_95 = arith.constant dense<0xFF800000> : vector<16xf32>
    %147 = vector.multi_reduction <maximumf>, %146, %cst_95 [1] : vector<16x16xf32> to vector<16xf32>
    %148 = vector.shape_cast %147 : vector<16xf32> to vector<16x1xf32>
    %149 = vector.broadcast %148 : vector<16x1xf32> to vector<16x16xf32>
    %150 = arith.subf %146, %149 : vector<16x16xf32>
    %151 = math.exp %150 : vector<16x16xf32>
    %cst_96 = arith.constant dense<0.000000e+00> : vector<16xf32>
    %152 = vector.multi_reduction <add>, %151, %cst_96 [1] : vector<16x16xf32> to vector<16xf32>
    %153 = vector.shape_cast %152 : vector<16xf32> to vector<16x1xf32>
    %154 = tpu.reciprocal %153 {approx = true} : vector<16x1xf32> -> vector<16x1xf32>
    %155 = vector.broadcast %154 : vector<16x1xf32> to vector<16x16xf32>
    %156 = arith.mulf %151, %155 : vector<16x16xf32>
    %cst_97 = arith.constant dense<0.000000e+00> : vector<16x32xf32>
    %157 = tpu.matmul %156, %144, %cst_97 {dimension_numbers = #tpu.dot_dimension_numbers<[1], [0], [0], [1], [0, 0, 1, 1], [], []>} : vector<16x16xf32>, vector<16x32xf32>, vector<16x32xf32> -> vector<16x32xf32>
    %c1_98 = arith.constant 1 : index
    %c0_99 = arith.constant 0 : index
    %c0_100 = arith.constant 0 : index
    %158 = vector.load %arg9[%c1_98, %c0_99, %c0_100] : memref<2x32x32xf32, #tpu.memory_space<vmem>>, vector<1x32x32xf32>
    %159 = vector.shape_cast %158 : vector<1x32x32xf32> to vector<32x32xf32>
    %cst_101 = arith.constant dense<0.000000e+00> : vector<16x32xf32>
    %160 = tpu.matmul %157, %159, %cst_101 {dimension_numbers = #tpu.dot_dimension_numbers<[1], [0], [0], [1], [0, 0, 1, 1], [], []>} : vector<16x32xf32>, vector<32x32xf32>, vector<16x32xf32> -> vector<16x32xf32>
    %c1_102 = arith.constant 1 : index
    %c0_103 = arith.constant 0 : index
    %c0_104 = arith.constant 0 : index
    %161 = vector.load %arg10[%c1_102, %c0_103, %c0_104] : memref<2x1x32xf32, #tpu.memory_space<vmem>>, vector<1x1x32xf32>
    %162 = vector.shape_cast %161 : vector<1x1x32xf32> to vector<1x32xf32>
    %163 = vector.broadcast %162 : vector<1x32xf32> to vector<16x32xf32>
    %164 = arith.addf %160, %163 : vector<16x32xf32>
    %165 = arith.addf %123, %164 : vector<16x32xf32>
    %c1_105 = arith.constant 1 : index
    %c0_106 = arith.constant 0 : index
    %c0_107 = arith.constant 0 : index
    %166 = vector.load %arg11[%c1_105, %c0_106, %c0_107] : memref<2x1x32xf32, #tpu.memory_space<vmem>>, vector<1x1x32xf32>
    %167 = vector.shape_cast %166 : vector<1x1x32xf32> to vector<1x32xf32>
    %c1_108 = arith.constant 1 : index
    %c0_109 = arith.constant 0 : index
    %c0_110 = arith.constant 0 : index
    %168 = vector.load %arg12[%c1_108, %c0_109, %c0_110] : memref<2x1x32xf32, #tpu.memory_space<vmem>>, vector<1x1x32xf32>
    %169 = vector.shape_cast %168 : vector<1x1x32xf32> to vector<1x32xf32>
    %cst_111 = arith.constant dense<0.000000e+00> : vector<16xf32>
    %170 = vector.multi_reduction <add>, %165, %cst_111 [1] : vector<16x32xf32> to vector<16xf32>
    %171 = vector.shape_cast %170 : vector<16xf32> to vector<16x1xf32>
    %cst_112 = arith.constant 3.200000e+01 : f32
    %172 = vector.broadcast %cst_112 : f32 to vector<16x1xf32>
    %173 = arith.divf %171, %172 : vector<16x1xf32>
    %174 = vector.broadcast %173 : vector<16x1xf32> to vector<16x32xf32>
    %175 = arith.subf %165, %174 : vector<16x32xf32>
    %176 = arith.mulf %175, %175 : vector<16x32xf32>
    %cst_113 = arith.constant dense<0.000000e+00> : vector<16xf32>
    %177 = vector.multi_reduction <add>, %176, %cst_113 [1] : vector<16x32xf32> to vector<16xf32>
    %178 = vector.shape_cast %177 : vector<16xf32> to vector<16x1xf32>
    %cst_114 = arith.constant 3.200000e+01 : f32
    %179 = vector.broadcast %cst_114 : f32 to vector<16x1xf32>
    %180 = arith.divf %178, %179 : vector<16x1xf32>
    %181 = vector.broadcast %173 : vector<16x1xf32> to vector<16x32xf32>
    %182 = arith.subf %165, %181 : vector<16x32xf32>
    %cst_115 = arith.constant 9.99999996E-13 : f32
    %183 = vector.broadcast %cst_115 : f32 to vector<16x1xf32>
    %184 = arith.addf %180, %183 : vector<16x1xf32>
    %185 = math.rsqrt %184 : vector<16x1xf32>
    %186 = vector.broadcast %185 : vector<16x1xf32> to vector<16x32xf32>
    %187 = arith.mulf %182, %186 : vector<16x32xf32>
    %188 = vector.broadcast %167 : vector<1x32xf32> to vector<16x32xf32>
    %189 = arith.mulf %187, %188 : vector<16x32xf32>
    %190 = vector.broadcast %169 : vector<1x32xf32> to vector<16x32xf32>
    %191 = arith.addf %189, %190 : vector<16x32xf32>
    %c1_116 = arith.constant 1 : index
    %c0_117 = arith.constant 0 : index
    %c0_118 = arith.constant 0 : index
    %192 = vector.load %arg13[%c1_116, %c0_117, %c0_118] : memref<2x32x64xf32, #tpu.memory_space<vmem>>, vector<1x32x64xf32>
    %193 = vector.shape_cast %192 : vector<1x32x64xf32> to vector<32x64xf32>
    %cst_119 = arith.constant dense<0.000000e+00> : vector<16x64xf32>
    %194 = tpu.matmul %191, %193, %cst_119 {dimension_numbers = #tpu.dot_dimension_numbers<[1], [0], [0], [1], [0, 0, 1, 1], [], []>} : vector<16x32xf32>, vector<32x64xf32>, vector<16x64xf32> -> vector<16x64xf32>
    %c1_120 = arith.constant 1 : index
    %c0_121 = arith.constant 0 : index
    %c0_122 = arith.constant 0 : index
    %195 = vector.load %arg14[%c1_120, %c0_121, %c0_122] : memref<2x1x64xf32, #tpu.memory_space<vmem>>, vector<1x1x64xf32>
    %196 = vector.shape_cast %195 : vector<1x1x64xf32> to vector<1x64xf32>
    %197 = vector.broadcast %196 : vector<1x64xf32> to vector<16x64xf32>
    %198 = arith.addf %194, %197 : vector<16x64xf32>
    %199 = arith.mulf %198, %198 : vector<16x64xf32>
    %200 = arith.mulf %198, %199 : vector<16x64xf32>
    %cst_123 = arith.constant 4.471500e-02 : f32
    %201 = vector.broadcast %cst_123 : f32 to vector<16x64xf32>
    %202 = arith.mulf %201, %200 : vector<16x64xf32>
    %203 = arith.addf %198, %202 : vector<16x64xf32>
    %cst_124 = arith.constant 0.797884583 : f32
    %204 = vector.broadcast %cst_124 : f32 to vector<16x64xf32>
    %205 = arith.mulf %204, %203 : vector<16x64xf32>
    %206 = math.tanh %205 : vector<16x64xf32>
    %cst_125 = arith.constant 1.000000e+00 : f32
    %207 = vector.broadcast %cst_125 : f32 to vector<16x64xf32>
    %208 = arith.addf %207, %206 : vector<16x64xf32>
    %cst_126 = arith.constant 5.000000e-01 : f32
    %209 = vector.broadcast %cst_126 : f32 to vector<16x64xf32>
    %210 = arith.mulf %209, %208 : vector<16x64xf32>
    %211 = arith.mulf %198, %210 : vector<16x64xf32>
    %c1_127 = arith.constant 1 : index
    %c0_128 = arith.constant 0 : index
    %c0_129 = arith.constant 0 : index
    %212 = vector.load %arg15[%c1_127, %c0_128, %c0_129] : memref<2x64x32xf32, #tpu.memory_space<vmem>>, vector<1x64x32xf32>
    %213 = vector.shape_cast %212 : vector<1x64x32xf32> to vector<64x32xf32>
    %cst_130 = arith.constant dense<0.000000e+00> : vector<16x32xf32>
    %214 = tpu.matmul %211, %213, %cst_130 {dimension_numbers = #tpu.dot_dimension_numbers<[1], [0], [0], [1], [0, 0, 1, 1], [], []>} : vector<16x64xf32>, vector<64x32xf32>, vector<16x32xf32> -> vector<16x32xf32>
    %c1_131 = arith.constant 1 : index
    %c0_132 = arith.constant 0 : index
    %c0_133 = arith.constant 0 : index
    %215 = vector.load %arg16[%c1_131, %c0_132, %c0_133] : memref<2x1x32xf32, #tpu.memory_space<vmem>>, vector<1x1x32xf32>
    %216 = vector.shape_cast %215 : vector<1x1x32xf32> to vector<1x32xf32>
    %217 = vector.broadcast %216 : vector<1x32xf32> to vector<16x32xf32>
    %218 = arith.addf %214, %217 : vector<16x32xf32>
    %219 = arith.addf %191, %218 : vector<16x32xf32>
    %c1_134 = arith.constant 1 : index
    %c0_135 = arith.constant 0 : index
    %c0_136 = arith.constant 0 : index
    %220 = vector.load %arg17[%c1_134, %c0_135, %c0_136] : memref<2x1x32xf32, #tpu.memory_space<vmem>>, vector<1x1x32xf32>
    %221 = vector.shape_cast %220 : vector<1x1x32xf32> to vector<1x32xf32>
    %c1_137 = arith.constant 1 : index
    %c0_138 = arith.constant 0 : index
    %c0_139 = arith.constant 0 : index
    %222 = vector.load %arg18[%c1_137, %c0_138, %c0_139] : memref<2x1x32xf32, #tpu.memory_space<vmem>>, vector<1x1x32xf32>
    %223 = vector.shape_cast %222 : vector<1x1x32xf32> to vector<1x32xf32>
    %cst_140 = arith.constant dense<0.000000e+00> : vector<16xf32>
    %224 = vector.multi_reduction <add>, %219, %cst_140 [1] : vector<16x32xf32> to vector<16xf32>
    %225 = vector.shape_cast %224 : vector<16xf32> to vector<16x1xf32>
    %cst_141 = arith.constant 3.200000e+01 : f32
    %226 = vector.broadcast %cst_141 : f32 to vector<16x1xf32>
    %227 = arith.divf %225, %226 : vector<16x1xf32>
    %228 = vector.broadcast %227 : vector<16x1xf32> to vector<16x32xf32>
    %229 = arith.subf %219, %228 : vector<16x32xf32>
    %230 = arith.mulf %229, %229 : vector<16x32xf32>
    %cst_142 = arith.constant dense<0.000000e+00> : vector<16xf32>
    %231 = vector.multi_reduction <add>, %230, %cst_142 [1] : vector<16x32xf32> to vector<16xf32>
    %232 = vector.shape_cast %231 : vector<16xf32> to vector<16x1xf32>
    %cst_143 = arith.constant 3.200000e+01 : f32
    %233 = vector.broadcast %cst_143 : f32 to vector<16x1xf32>
    %234 = arith.divf %232, %233 : vector<16x1xf32>
    %235 = vector.broadcast %227 : vector<16x1xf32> to vector<16x32xf32>
    %236 = arith.subf %219, %235 : vector<16x32xf32>
    %cst_144 = arith.constant 9.99999996E-13 : f32
    %237 = vector.broadcast %cst_144 : f32 to vector<16x1xf32>
    %238 = arith.addf %234, %237 : vector<16x1xf32>
    %239 = math.rsqrt %238 : vector<16x1xf32>
    %240 = vector.broadcast %239 : vector<16x1xf32> to vector<16x32xf32>
    %241 = arith.mulf %236, %240 : vector<16x32xf32>
    %242 = vector.broadcast %221 : vector<1x32xf32> to vector<16x32xf32>
    %243 = arith.mulf %241, %242 : vector<16x32xf32>
    %244 = vector.broadcast %223 : vector<1x32xf32> to vector<16x32xf32>
    %245 = arith.addf %243, %244 : vector<16x32xf32>
    %c0_145 = arith.constant 0 : index
    %c0_146 = arith.constant 0 : index
    %c0_147 = arith.constant 0 : index
    %246 = vector.load %arg2[%c0_145, %c0_146, %c0_147] : memref<2x2x16xf32, #tpu.memory_space<vmem>>, vector<1x2x16xf32>
    %247 = vector.shape_cast %246 : vector<1x2x16xf32> to vector<2x16xf32>
    %c1_148 = arith.constant 1 : index
    %c0_149 = arith.constant 0 : index
    %c0_150 = arith.constant 0 : index
    %248 = vector.load %arg2[%c1_148, %c0_149, %c0_150] : memref<2x2x16xf32, #tpu.memory_space<vmem>>, vector<1x2x16xf32>
    %249 = vector.shape_cast %248 : vector<1x2x16xf32> to vector<2x16xf32>
    %cst_151 = arith.constant dense<0.000000e+00> : vector<2x32xf32>
    %250 = tpu.matmul %247, %245, %cst_151 {dimension_numbers = #tpu.dot_dimension_numbers<[1], [0], [0], [1], [0, 0, 1, 1], [], []>} : vector<2x16xf32>, vector<16x32xf32>, vector<2x32xf32> -> vector<2x32xf32>
    %cst_152 = arith.constant dense<0.000000e+00> : vector<2xf32>
    %251 = vector.multi_reduction <add>, %249, %cst_152 [1] : vector<2x16xf32> to vector<2xf32>
    %252 = vector.shape_cast %251 : vector<2xf32> to vector<2x1xf32>
    %cst_153 = arith.constant 9.99999971E-10 : f32
    %253 = vector.broadcast %cst_153 : f32 to vector<2x1xf32>
    %254 = arith.maximumf %252, %253 : vector<2x1xf32>
    %255 = vector.broadcast %254 : vector<2x1xf32> to vector<2x32xf32>
    %256 = arith.divf %250, %255 : vector<2x32xf32>
    %c0_154 = arith.constant 0 : index
    %c0_155 = arith.constant 0 : index
    %257 = vector.load %arg19[%c0_154, %c0_155] : memref<2x32xf32, #tpu.memory_space<vmem>>, vector<2x32xf32>
    tpu.vector_store %arg19[%c0_154, %c0_155], %256 {strides = array<i32>} : memref<2x32xf32, #tpu.memory_space<vmem>>, vector<2x32xf32>,
    return
  }
}

</mosaic_0001>

<llo_original>
// kernel: tpu_custom_call.1
$region0: #{tpu_custom_call.1}
  #allocation0 [shape = 'u32[]', space=smem, size = 0x4, offset = 0x4, fixed_abs, tag = 'smem constant byte address 0x4 - core index']
  #allocation1 [shape = 'u32[144,128]{1,0:T(1,128)}', space=vmem, size = 0x12000, scoped, tag = 'internal scratch']
  %s0 = inlined_call_operand.hbm [shape: f32[16,32], index: 0, kind: input, shape index: {}]
  %s1 = inlined_call_operand.hbm [shape: f32[16,16], index: 1, kind: input, shape index: {}]
  %s2 = inlined_call_operand.vmem [shape: f32[2,2,16], index: 2, kind: input, shape index: {}]
  %s3 = inlined_call_operand.vmem [shape: f32[2,32,32], index: 3, kind: input, shape index: {}]
  %s4 = inlined_call_operand.vmem [shape: f32[2,1,32], index: 4, kind: input, shape index: {}]
  %s5 = inlined_call_operand.vmem [shape: f32[2,32,32], index: 5, kind: input, shape index: {}]
  %s6 = inlined_call_operand.vmem [shape: f32[2,1,32], index: 6, kind: input, shape index: {}]
  %s7 = inlined_call_operand.vmem [shape: f32[2,32,32], index: 7, kind: input, shape index: {}]
  %s8 = inlined_call_operand.vmem [shape: f32[2,1,32], index: 8, kind: input, shape index: {}]
  %s9 = inlined_call_operand.hbm [shape: f32[2,32,32], index: 9, kind: input, shape index: {}]
  %s10 = inlined_call_operand.vmem [shape: f32[2,1,32], index: 10, kind: input, shape index: {}]
  %s11 = inlined_call_operand.vmem [shape: f32[2,1,32], index: 11, kind: input, shape index: {}]
  %s12 = inlined_call_operand.vmem [shape: f32[2,1,32], index: 12, kind: input, shape index: {}]
  %s13 = inlined_call_operand.hbm [shape: f32[2,32,64], index: 13, kind: input, shape index: {}]
  %s14 = inlined_call_operand.vmem [shape: f32[2,1,64], index: 14, kind: input, shape index: {}]
  %s15 = inlined_call_operand.vmem [shape: f32[2,64,32], index: 15, kind: input, shape index: {}]
  %s16 = inlined_call_operand.vmem [shape: f32[2,1,32], index: 16, kind: input, shape index: {}]
  %s17 = inlined_call_operand.vmem [shape: f32[2,1,32], index: 17, kind: input, shape index: {}]
  %s18 = inlined_call_operand.vmem [shape: f32[2,1,32], index: 18, kind: input, shape index: {}]
  %s19 = inlined_call_operand.hbm [shape: f32[2,32], index: 19, kind: output, shape index: {}]
  %s20 = sld [smem:[#allocation0]]
  $region102: #{tpu_custom_call.1} parent=0
    _
  %s22 = ssub.s32 1, %s20
  %s23 = scalar_select 0, %s22, %s20
  $region1: #{tpu_custom_call.1} parent=0
    #allocation2 [shape = 'u8[8192]{0}', space=vmem, size = 0x2000, scoped, tag = 'input window, operand 0, single buffered']
    #allocation3 [shape = 's32[1]{0}', space=sflag, size = 0x4, scoped, tag = 'scoped memory for tpu_custom_call.1']
    #allocation4 [shape = 's32[1]{0}', space=sflag, size = 0x4, scoped, tag = 'scoped memory for tpu_custom_call.1']
    #allocation5 [shape = 'u8[8192]{0}', space=vmem, size = 0x2000, scoped, tag = 'input window, operand 1, single buffered']
    #allocation6 [shape = 's32[1]{0}', space=sflag, size = 0x4, scoped, tag = 'scoped memory for tpu_custom_call.1']
    #allocation7 [shape = 'u8[32768]{0}', space=vmem, size = 0x8000, scoped, tag = 'input window, operand 9, single buffered']
    #allocation8 [shape = 'u8[32768]{0}', space=vmem, size = 0x8000, scoped, tag = 'input window, operand 13, single buffered']
    #allocation9 [shape = 's32[1]{0}', space=sflag, size = 0x4, scoped, tag = 'scoped memory for tpu_custom_call.1']
    #allocation10 [shape = 'u8[1024]{0}', space=vmem, size = 0x400, scoped, tag = 'output window, operand 0, single buffered']
    %24 = vsyncpa [#allocation3], 0
    %25 = vsyncpa [#allocation6], 0
    %26 = vsyncpa [#allocation9], 0
    %27 = vsyncpa [#allocation4], 0
    // Predicated region
    $region2: #{tpu_custom_call.1} parent=1 // pred_check
      _
    $region3: #{tpu_custom_call.1} parent=1 // pred_check_branch
      %29 = sbr.rel (0) target = $region5
    $region4: #{tpu_custom_call.1} parent=1 // pred_region
      %s31 = ssub.s32 256, 256
      %32 = vsyncadd [#allocation3], %s31
      %s33 = sshll.u32 [#allocation2], 4
      %s34 = int_to_ptr.vmem [resolvable:$true] %s33
      %39 = dma.hbm_to_vmem [thread:$0]  %s0, 256, %s34, [#allocation3], 128, 128, 8
    $region5: #{tpu_custom_call.1} parent=1 // pred_fallthru
      _
    // Predicated region
    $region6: #{tpu_custom_call.1} parent=1 // pred_check
      _
    $region7: #{tpu_custom_call.1} parent=1 // pred_check_branch
      %41 = sbr.rel (0) target = $region9
    $region8: #{tpu_custom_call.1} parent=1 // pred_region
      %s43 = ssub.s32 256, 256
      %44 = vsyncadd [#allocation6], %s43
      %s45 = sshll.u32 [#allocation5], 4
      %s46 = int_to_ptr.vmem [resolvable:$true] %s45
      %51 = dma.hbm_to_vmem [thread:$0]  %s1, 256, %s46, [#allocation6], 128, 128, 8
    $region9: #{tpu_custom_call.1} parent=1 // pred_fallthru
      _
    // Predicated region
    $region10: #{tpu_custom_call.1} parent=1 // pred_check
      _
    $region11: #{tpu_custom_call.1} parent=1 // pred_check_branch
      %53 = sbr.rel (0) target = $region13
    $region12: #{tpu_custom_call.1} parent=1 // pred_region
      _
    $region13: #{tpu_custom_call.1} parent=1 // pred_fallthru
      _
    // Predicated region
    $region14: #{tpu_custom_call.1} parent=1 // pred_check
      _
    $region15: #{tpu_custom_call.1} parent=1 // pred_check_branch
      %55 = sbr.rel (0) target = $region17
    $region16: #{tpu_custom_call.1} parent=1 // pred_region
      _
    $region17: #{tpu_custom_call.1} parent=1 // pred_fallthru
      _
    // Predicated region
    $region18: #{tpu_custom_call.1} parent=1 // pred_check
      _
    $region19: #{tpu_custom_call.1} parent=1 // pred_check_branch
      %57 = sbr.rel (0) target = $region21
    $region20: #{tpu_custom_call.1} parent=1 // pred_region
      _
    $region21: #{tpu_custom_call.1} parent=1 // pred_fallthru
      _
    // Predicated region
    $region22: #{tpu_custom_call.1} parent=1 // pred_check
      _
    $region23: #{tpu_custom_call.1} parent=1 // pred_check_branch
      %59 = sbr.rel (0) target = $region25
    $region24: #{tpu_custom_call.1} parent=1 // pred_region
      _
    $region25: #{tpu_custom_call.1} parent=1 // pred_fallthru
      _
    // Predicated region
    $region26: #{tpu_custom_call.1} parent=1 // pred_check
      _
    $region27: #{tpu_custom_call.1} parent=1 // pred_check_branch
      %61 = sbr.rel (0) target = $region29
    $region28: #{tpu_custom_call.1} parent=1 // pred_region
      _
    $region29: #{tpu_custom_call.1} parent=1 // pred_fallthru
      _
    // Predicated region
    $region30: #{tpu_custom_call.1} parent=1 // pred_check
      _
    $region31: #{tpu_custom_call.1} parent=1 // pred_check_branch
      %63 = sbr.rel (0) target = $region33
    $region32: #{tpu_custom_call.1} parent=1 // pred_region
      _
    $region33: #{tpu_custom_call.1} parent=1 // pred_fallthru
      _
    // Predicated region
    $region34: #{tpu_custom_call.1} parent=1 // pred_check
      _
    $region35: #{tpu_custom_call.1} parent=1 // pred_check_branch
      %65 = sbr.rel (0) target = $region37
    $region36: #{tpu_custom_call.1} parent=1 // pred_region
      _
    $region37: #{tpu_custom_call.1} parent=1 // pred_fallthru
      _
    // Predicated region
    $region38: #{tpu_custom_call.1} parent=1 // pred_check
      _
    $region39: #{tpu_custom_call.1} parent=1 // pred_check_branch
      %67 = sbr.rel (0) target = $region41
    $region40: #{tpu_custom_call.1} parent=1 // pred_region
      %s69 = ssub.s32 1024, 1024
      %70 = vsyncadd [#allocation6], %s69
      %s71 = sshll.u32 [#allocation7], 4
      %s72 = int_to_ptr.vmem [resolvable:$true] %s71
      %77 = dma.hbm_to_vmem [thread:$0]  %s9, 1024, %s72, [#allocation6], 128, 128, 8
    $region41: #{tpu_custom_call.1} parent=1 // pred_fallthru
      _
    // Predicated region
    $region42: #{tpu_custom_call.1} parent=1 // pred_check
      _
    $region43: #{tpu_custom_call.1} parent=1 // pred_check_branch
      %79 = sbr.rel (0) target = $region45
    $region44: #{tpu_custom_call.1} parent=1 // pred_region
      _
    $region45: #{tpu_custom_call.1} parent=1 // pred_fallthru
      _
    // Predicated region
    $region46: #{tpu_custom_call.1} parent=1 // pred_check
      _
    $region47: #{tpu_custom_call.1} parent=1 // pred_check_branch
      %81 = sbr.rel (0) target = $region49
    $region48: #{tpu_custom_call.1} parent=1 // pred_region
      _
    $region49: #{tpu_custom_call.1} parent=1 // pred_fallthru
      _
    // Predicated region
    $region50: #{tpu_custom_call.1} parent=1 // pred_check
      _
    $region51: #{tpu_custom_call.1} parent=1 // pred_check_branch
      %83 = sbr.rel (0) target = $region53
    $region52: #{tpu_custom_call.1} parent=1 // pred_region
      _
    $region53: #{tpu_custom_call.1} parent=1 // pred_fallthru
      _
    // Predicated region
    $region54: #{tpu_custom_call.1} parent=1 // pred_check
      _
    $region55: #{tpu_custom_call.1} parent=1 // pred_check_branch
      %85 = sbr.rel (0) target = $region57
    $region56: #{tpu_custom_call.1} parent=1 // pred_region
      %s87 = ssub.s32 1024, 1024
      %88 = vsyncadd [#allocation9], %s87
      %s89 = sshll.u32 [#allocation8], 4
      %s90 = int_to_ptr.vmem [resolvable:$true] %s89
      %95 = dma.hbm_to_vmem [thread:$0]  %s13, 1024, %s90, [#allocation9], 128, 128, 8
    $region57: #{tpu_custom_call.1} parent=1 // pred_fallthru
      _
    // Predicated region
    $region58: #{tpu_custom_call.1} parent=1 // pred_check
      _
    $region59: #{tpu_custom_call.1} parent=1 // pred_check_branch
      %97 = sbr.rel (0) target = $region61
    $region60: #{tpu_custom_call.1} parent=1 // pred_region
      _
    $region61: #{tpu_custom_call.1} parent=1 // pred_fallthru
      _
    // Predicated region
    $region62: #{tpu_custom_call.1} parent=1 // pred_check
      _
    $region63: #{tpu_custom_call.1} parent=1 // pred_check_branch
      %99 = sbr.rel (0) target = $region65
    $region64: #{tpu_custom_call.1} parent=1 // pred_region
      _
    $region65: #{tpu_custom_call.1} parent=1 // pred_fallthru
      _
    // Predicated region
    $region66: #{tpu_custom_call.1} parent=1 // pred_check
      _
    $region67: #{tpu_custom_call.1} parent=1 // pred_check_branch
      %101 = sbr.rel (0) target = $region69
    $region68: #{tpu_custom_call.1} parent=1 // pred_region
      _
    $region69: #{tpu_custom_call.1} parent=1 // pred_fallthru
      _
    // Predicated region
    $region70: #{tpu_custom_call.1} parent=1 // pred_check
      _
    $region71: #{tpu_custom_call.1} parent=1 // pred_check_branch
      %103 = sbr.rel (0) target = $region73
    $region72: #{tpu_custom_call.1} parent=1 // pred_region
      _
    $region73: #{tpu_custom_call.1} parent=1 // pred_fallthru
      _
    // Predicated region
    $region74: #{tpu_custom_call.1} parent=1 // pred_check
      _
    $region75: #{tpu_custom_call.1} parent=1 // pred_check_branch
      %105 = sbr.rel (0) target = $region77
    $region76: #{tpu_custom_call.1} parent=1 // pred_region
      _
    $region77: #{tpu_custom_call.1} parent=1 // pred_fallthru
      _
    // Predicated region
    $region78: #{tpu_custom_call.1} parent=1 // pred_check
      _
    $region79: #{tpu_custom_call.1} parent=1 // pred_check_branch
      %107 = sbr.rel (0) target = $region81
    $region80: #{tpu_custom_call.1} parent=1 // pred_region
      %108 = dma.done [#allocation3], 256
    $region81: #{tpu_custom_call.1} parent=1 // pred_fallthru
      _
    // Predicated region
    $region82: #{tpu_custom_call.1} parent=1 // pred_check
      _
    $region83: #{tpu_custom_call.1} parent=1 // pred_check_branch
      %110 = sbr.rel (0) target = $region85
    $region84: #{tpu_custom_call.1} parent=1 // pred_region
      %111 = dma.done [#allocation6], 256
    $region85: #{tpu_custom_call.1} parent=1 // pred_fallthru
      _
    // Predicated region
    $region86: #{tpu_custom_call.1} parent=1 // pred_check
      _
    $region87: #{tpu_custom_call.1} parent=1 // pred_check_branch
      %113 = sbr.rel (0) target = $region89
    $region88: #{tpu_custom_call.1} parent=1 // pred_region
      %114 = dma.done [#allocation6], 1024
    $region89: #{tpu_custom_call.1} parent=1 // pred_fallthru
      _
    // Predicated region
    $region90: #{tpu_custom_call.1} parent=1 // pred_check
      _
    $region91: #{tpu_custom_call.1} parent=1 // pred_check_branch
      %116 = sbr.rel (0) target = $region93
    $region92: #{tpu_custom_call.1} parent=1 // pred_region
      %117 = dma.done [#allocation9], 1024
    $region93: #{tpu_custom_call.1} parent=1 // pred_fallthru
      _
    %v118 = vld [vmem:[#allocation2] sm:$0xff]
    %v119 = vld [vmem:[#allocation2 + $0x8] sm:$0xff]
    %v120 = vld [vmem:[#allocation5] sm:$0xff]
    %v121 = vld [vmem:[#allocation5 + $0x8] sm:$0xff]
    %v122 = vld [vmem:[%s3] sm:$0xff]
    %v123 = vld [vmem:[%s3 + $0x8] sm:$0xff]
    %v124 = vld [vmem:[%s3 + $0x10] sm:$0xff]
    %v125 = vld [vmem:[%s3 + $0x18] sm:$0xff]
    %v126 = vld [vmem:[%s4] sm:$0x1]
    %v128 = vlaneseq
    %v129 = vshrl.u32 %v128, 7
    %v130 = vsub.s32 0, %v129
    %v131 = vrot.slane %v126, %v130
    %vm133 = vcmask 261120
    %v135 = vsel %vm133, %v118, 0
    %v138 = vsel %vm133, %v119, 0
    %140 = vmatprep.subr.mxu0 0.0
    %141 = vmatpush1.msra.mxu0 %v122
    %142 = vmatprep.subr.mxu0 0.0
    %143 = vmatpush1.msra.mxu0 %v123
    %144 = vmatprep.subr.mxu0 0.0
    %145 = vmatpush1.msra.mxu0 %v124
    %146 = vmatprep.subr.mxu0 0.0
    %147 = vmatpush1.msra.mxu0 %v125
    %148 = vmatprep.subr.mxu0 0.0
    %149 = vmatpush1.msra.mxu0 0.0
    %150 = vmatprep.subr.mxu0 0.0
    %151 = vmatpush1.msra.mxu0 0.0
    %152 = vmatprep.subr.mxu0 0.0
    %153 = vmatpush1.msra.mxu0 0.0
    %154 = vmatprep.subr.mxu0 0.0
    %155 = vmatpush1.msra.mxu0 0.0
    %156 = vmatprep.subr.mxu0 0.0
    %157 = vmatpush1.msra.mxu0 0.0
    %158 = vmatprep.subr.mxu0 0.0
    %159 = vmatpush1.msra.mxu0 0.0
    %160 = vmatprep.subr.mxu0 0.0
    %161 = vmatpush1.msra.mxu0 0.0
    %162 = vmatprep.subr.mxu0 0.0
    %163 = vmatpush1.msra.mxu0 0.0
    %164 = vmatprep.subr.mxu0 0.0
    %165 = vmatpush1.msra.mxu0 0.0
    %166 = vmatprep.subr.mxu0 0.0
    %167 = vmatpush1.msra.mxu0 0.0
    %168 = vmatprep.subr.mxu0 0.0
    %169 = vmatpush1.msra.mxu0 0.0
    %170 = vmatprep.subr.mxu0 0.0
    %171 = vmatpush1.msra.mxu0 0.0
    %172 = vmatprep.subr.mxu0 0.0
    %173 = vmatpush1.msra.mxu0 0.0
    %174 = vmatprep.subr.mxu0 0.0
    %175 = vmatpush1.msra.mxu0 0.0
    %176 = vmatprep.subr.mxu0 0.0
    %177 = vmatpush1.msra.mxu0 0.0
    %178 = vmatprep.subr.mxu0 0.0
    %179 = vmatpush1.msra.mxu0 0.0
    %180 = vmatprep.subr.mxu0 0.0
    %181 = vmatpush1.msra.mxu0 0.0
    %182 = vmatprep.subr.mxu0 0.0
    %183 = vmatpush1.msra.mxu0 0.0
    %184 = vmatprep.subr.mxu0 0.0
    %185 = vmatpush1.msra.mxu0 0.0
    %186 = vmatprep.subr.mxu0 0.0
    %187 = vmatpush1.msra.mxu0 0.0
    %188 = vmatprep.subr.mxu0 0.0
    %189 = vmatpush1.msra.mxu0 0.0
    %190 = vmatprep.subr.mxu0 0.0
    %191 = vmatpush1.msra.mxu0 0.0
    %192 = vmatprep.subr.mxu0 0.0
    %193 = vmatpush1.msra.mxu0 0.0
    %194 = vmatprep.subr.mxu0 0.0
    %195 = vmatpush1.msra.mxu0 0.0
    %196 = vmatprep.subr.mxu0 0.0
    %197 = vmatpush1.msra.mxu0 0.0
    %198 = vmatprep.subr.mxu0 0.0
    %199 = vmatpush1.msra.mxu0 0.0
    %200 = vmatprep.subr.mxu0 0.0
    %201 = vmatpush1.msra.mxu0 0.0
    %202 = vmatprep.subr.mxu0 0.0
    %203 = vmatpush1.msra.mxu0 0.0
    %204 = vmatprep.mubr.f32.mxu0 0.0
    %205 = vmatmul.mubr.f32.gmra.mrb[0].mxu0 %v135
    %v206 = vpop.f32.mrb[0].mxu0
    %v207 = vadd.f32 %v131, %v206
    %v208 = vpop.f32.mrb[0].mxu0
    %209 = vmatprep.mubr.f32.mxu0 0.0
    %210 = vmatmul.mubr.f32.gmra.mrb[0].mxu0 %v138
    %v211 = vpop.f32.mrb[0].mxu0
    %v212 = vadd.f32 %v131, %v211
    %v213 = vpop.f32.mrb[0].mxu0
    %214 = vdwg.mxu0
    %v215 = vld [vmem:[%s5] sm:$0xff]
    %v216 = vld [vmem:[%s5 + $0x8] sm:$0xff]
    %v217 = vld [vmem:[%s5 + $0x10] sm:$0xff]
    %v218 = vld [vmem:[%s5 + $0x18] sm:$0xff]
    %v219 = vld [vmem:[%s6] sm:$0x1]
    %v221 = vlaneseq
    %v222 = vshrl.u32 %v221, 7
    %v223 = vsub.s32 0, %v222
    %v224 = vrot.slane %v219, %v223
    %226 = vmatprep.subr.mxu0 0.0
    %227 = vmatpush1.msra.mxu0 %v215
    %228 = vmatprep.subr.mxu0 0.0
    %229 = vmatpush1.msra.mxu0 %v216
    %230 = vmatprep.subr.mxu0 0.0
    %231 = vmatpush1.msra.mxu0 %v217
    %232 = vmatprep.subr.mxu0 0.0
    %233 = vmatpush1.msra.mxu0 %v218
    %234 = vmatprep.subr.mxu0 0.0
    %235 = vmatpush1.msra.mxu0 0.0
    %236 = vmatprep.subr.mxu0 0.0
    %237 = vmatpush1.msra.mxu0 0.0
    %238 = vmatprep.subr.mxu0 0.0
    %239 = vmatpush1.msra.mxu0 0.0
    %240 = vmatprep.subr.mxu0 0.0
    %241 = vmatpush1.msra.mxu0 0.0
    %242 = vmatprep.subr.mxu0 0.0
    %243 = vmatpush1.msra.mxu0 0.0
    %244 = vmatprep.subr.mxu0 0.0
    %245 = vmatpush1.msra.mxu0 0.0
    %246 = vmatprep.subr.mxu0 0.0
    %247 = vmatpush1.msra.mxu0 0.0
    %248 = vmatprep.subr.mxu0 0.0
    %249 = vmatpush1.msra.mxu0 0.0
    %250 = vmatprep.subr.mxu0 0.0
    %251 = vmatpush1.msra.mxu0 0.0
    %252 = vmatprep.subr.mxu0 0.0
    %253 = vmatpush1.msra.mxu0 0.0
    %254 = vmatprep.subr.mxu0 0.0
    %255 = vmatpush1.msra.mxu0 0.0
    %256 = vmatprep.subr.mxu0 0.0
    %257 = vmatpush1.msra.mxu0 0.0
    %258 = vmatprep.subr.mxu0 0.0
    %259 = vmatpush1.msra.mxu0 0.0
    %260 = vmatprep.subr.mxu0 0.0
    %261 = vmatpush1.msra.mxu0 0.0
    %262 = vmatprep.subr.mxu0 0.0
    %263 = vmatpush1.msra.mxu0 0.0
    %264 = vmatprep.subr.mxu0 0.0
    %265 = vmatpush1.msra.mxu0 0.0
    %266 = vmatprep.subr.mxu0 0.0
    %267 = vmatpush1.msra.mxu0 0.0
    %268 = vmatprep.subr.mxu0 0.0
    %269 = vmatpush1.msra.mxu0 0.0
    %270 = vmatprep.subr.mxu0 0.0
    %271 = vmatpush1.msra.mxu0 0.0
    %272 = vmatprep.subr.mxu0 0.0
    %273 = vmatpush1.msra.mxu0 0.0
    %274 = vmatprep.subr.mxu0 0.0
    %275 = vmatpush1.msra.mxu0 0.0
    %276 = vmatprep.subr.mxu0 0.0
    %277 = vmatpush1.msra.mxu0 0.0
    %278 = vmatprep.subr.mxu0 0.0
    %279 = vmatpush1.msra.mxu0 0.0
    %280 = vmatprep.subr.mxu0 0.0
    %281 = vmatpush1.msra.mxu0 0.0
    %282 = vmatprep.subr.mxu0 0.0
    %283 = vmatpush1.msra.mxu0 0.0
    %284 = vmatprep.subr.mxu0 0.0
    %285 = vmatpush1.msra.mxu0 0.0
    %286 = vmatprep.subr.mxu0 0.0
    %287 = vmatpush1.msra.mxu0 0.0
    %288 = vmatprep.subr.mxu0 0.0
    %289 = vmatpush1.msra.mxu0 0.0
    %290 = vmatprep.mubr.f32.mxu0 0.0
    %291 = vmatmul.mubr.f32.gmra.mrb[0].mxu0 %v135
    %v292 = vpop.f32.mrb[0].mxu0
    %v293 = vadd.f32 %v224, %v292
    %v294 = vpop.f32.mrb[0].mxu0
    %295 = vmatprep.mubr.f32.mxu0 0.0
    %296 = vmatmul.mubr.f32.gmra.mrb[0].mxu0 %v138
    %v297 = vpop.f32.mrb[0].mxu0
    %v298 = vadd.f32 %v224, %v297
    %v299 = vpop.f32.mrb[0].mxu0
    %300 = vdwg.mxu0
    %v301 = vld [vmem:[%s7] sm:$0xff]
    %v302 = vld [vmem:[%s7 + $0x8] sm:$0xff]
    %v303 = vld [vmem:[%s7 + $0x10] sm:$0xff]
    %v304 = vld [vmem:[%s7 + $0x18] sm:$0xff]
    %v305 = vld [vmem:[%s8] sm:$0x1]
    %v307 = vlaneseq
    %v308 = vshrl.u32 %v307, 7
    %v309 = vsub.s32 0, %v308
    %v310 = vrot.slane %v305, %v309
    %312 = vmatprep.subr.mxu0 0.0
    %313 = vmatpush1.msra.mxu0 %v301
    %314 = vmatprep.subr.mxu0 0.0
    %315 = vmatpush1.msra.mxu0 %v302
    %316 = vmatprep.subr.mxu0 0.0
    %317 = vmatpush1.msra.mxu0 %v303
    %318 = vmatprep.subr.mxu0 0.0
    %319 = vmatpush1.msra.mxu0 %v304
    %320 = vmatprep.subr.mxu0 0.0
    %321 = vmatpush1.msra.mxu0 0.0
    %322 = vmatprep.subr.mxu0 0.0
    %323 = vmatpush1.msra.mxu0 0.0
    %324 = vmatprep.subr.mxu0 0.0
    %325 = vmatpush1.msra.mxu0 0.0
    %326 = vmatprep.subr.mxu0 0.0
    %327 = vmatpush1.msra.mxu0 0.0
    %328 = vmatprep.subr.mxu0 0.0
    %329 = vmatpush1.msra.mxu0 0.0
    %330 = vmatprep.subr.mxu0 0.0
    %331 = vmatpush1.msra.mxu0 0.0
    %332 = vmatprep.subr.mxu0 0.0
    %333 = vmatpush1.msra.mxu0 0.0
    %334 = vmatprep.subr.mxu0 0.0
    %335 = vmatpush1.msra.mxu0 0.0
    %336 = vmatprep.subr.mxu0 0.0
    %337 = vmatpush1.msra.mxu0 0.0
    %338 = vmatprep.subr.mxu0 0.0
    %339 = vmatpush1.msra.mxu0 0.0
    %340 = vmatprep.subr.mxu0 0.0
    %341 = vmatpush1.msra.mxu0 0.0
    %342 = vmatprep.subr.mxu0 0.0
    %343 = vmatpush1.msra.mxu0 0.0
    %344 = vmatprep.subr.mxu0 0.0
    %345 = vmatpush1.msra.mxu0 0.0
    %346 = vmatprep.subr.mxu0 0.0
    %347 = vmatpush1.msra.mxu0 0.0
    %348 = vmatprep.subr.mxu0 0.0
    %349 = vmatpush1.msra.mxu0 0.0
    %350 = vmatprep.subr.mxu0 0.0
    %351 = vmatpush1.msra.mxu0 0.0
    %352 = vmatprep.subr.mxu0 0.0
    %353 = vmatpush1.msra.mxu0 0.0
    %354 = vmatprep.subr.mxu0 0.0
    %355 = vmatpush1.msra.mxu0 0.0
    %356 = vmatprep.subr.mxu0 0.0
    %357 = vmatpush1.msra.mxu0 0.0
    %358 = vmatprep.subr.mxu0 0.0
    %359 = vmatpush1.msra.mxu0 0.0
    %360 = vmatprep.subr.mxu0 0.0
    %361 = vmatpush1.msra.mxu0 0.0
    %362 = vmatprep.subr.mxu0 0.0
    %363 = vmatpush1.msra.mxu0 0.0
    %364 = vmatprep.subr.mxu0 0.0
    %365 = vmatpush1.msra.mxu0 0.0
    %366 = vmatprep.subr.mxu0 0.0
    %367 = vmatpush1.msra.mxu0 0.0
    %368 = vmatprep.subr.mxu0 0.0
    %369 = vmatpush1.msra.mxu0 0.0
    %370 = vmatprep.subr.mxu0 0.0
    %371 = vmatpush1.msra.mxu0 0.0
    %372 = vmatprep.subr.mxu0 0.0
    %373 = vmatpush1.msra.mxu0 0.0
    %374 = vmatprep.subr.mxu0 0.0
    %375 = vmatpush1.msra.mxu0 0.0
    %376 = vmatprep.mubr.f32.mxu0 0.0
    %377 = vmatmul.mubr.f32.gmra.mrb[0].mxu0 %v135
    %v378 = vpop.f32.mrb[0].mxu0
    %v379 = vadd.f32 %v310, %v378
    %v380 = vpop.f32.mrb[0].mxu0
    %381 = vmatprep.mubr.f32.mxu0 0.0
    %382 = vmatmul.mubr.f32.gmra.mrb[0].mxu0 %v138
    %v383 = vpop.f32.mrb[0].mxu0
    %v384 = vadd.f32 %v310, %v383
    %v385 = vpop.f32.mrb[0].mxu0
    %386 = vdwg.mxu0
    %v388 = vsel %vm133, %v207, 0
    %v391 = vsel %vm133, %v212, 0
    %v394 = vsel %vm133, %v293, 0
    %v397 = vsel %vm133, %v298, 0
    %399 = vmatprep.subr.mxu0 0.0
    %400 = vmatpush1.xpose.msra.mxu0 %v394
    %401 = vmatprep.subr.mxu0 0.0
    %402 = vmatpush1.xpose.msra.mxu0 %v397
    %403 = vmatprep.subr.mxu0 0.0
    %404 = vmatpush1.xpose.msra.mxu0 0.0
    %405 = vmatprep.subr.mxu0 0.0
    %406 = vmatpush1.xpose.msra.mxu0 0.0
    %407 = vmatprep.subr.mxu0 0.0
    %408 = vmatpush1.xpose.msra.mxu0 0.0
    %409 = vmatprep.subr.mxu0 0.0
    %410 = vmatpush1.xpose.msra.mxu0 0.0
    %411 = vmatprep.subr.mxu0 0.0
    %412 = vmatpush1.xpose.msra.mxu0 0.0
    %413 = vmatprep.subr.mxu0 0.0
    %414 = vmatpush1.xpose.msra.mxu0 0.0
    %415 = vmatprep.subr.mxu0 0.0
    %416 = vmatpush1.xpose.msra.mxu0 0.0
    %417 = vmatprep.subr.mxu0 0.0
    %418 = vmatpush1.xpose.msra.mxu0 0.0
    %419 = vmatprep.subr.mxu0 0.0
    %420 = vmatpush1.xpose.msra.mxu0 0.0
    %421 = vmatprep.subr.mxu0 0.0
    %422 = vmatpush1.xpose.msra.mxu0 0.0
    %423 = vmatprep.subr.mxu0 0.0
    %424 = vmatpush1.xpose.msra.mxu0 0.0
    %425 = vmatprep.subr.mxu0 0.0
    %426 = vmatpush1.xpose.msra.mxu0 0.0
    %427 = vmatprep.subr.mxu0 0.0
    %428 = vmatpush1.xpose.msra.mxu0 0.0
    %429 = vmatprep.subr.mxu0 0.0
    %430 = vmatpush1.xpose.msra.mxu0 0.0
    %431 = vmatprep.subr.mxu0 0.0
    %432 = vmatpush1.xpose.msra.mxu0 0.0
    %433 = vmatprep.subr.mxu0 0.0
    %434 = vmatpush1.xpose.msra.mxu0 0.0
    %435 = vmatprep.subr.mxu0 0.0
    %436 = vmatpush1.xpose.msra.mxu0 0.0
    %437 = vmatprep.subr.mxu0 0.0
    %438 = vmatpush1.xpose.msra.mxu0 0.0
    %439 = vmatprep.subr.mxu0 0.0
    %440 = vmatpush1.xpose.msra.mxu0 0.0
    %441 = vmatprep.subr.mxu0 0.0
    %442 = vmatpush1.xpose.msra.mxu0 0.0
    %443 = vmatprep.subr.mxu0 0.0
    %444 = vmatpush1.xpose.msra.mxu0 0.0
    %445 = vmatprep.subr.mxu0 0.0
    %446 = vmatpush1.xpose.msra.mxu0 0.0
    %447 = vmatprep.subr.mxu0 0.0
    %448 = vmatpush1.xpose.msra.mxu0 0.0
    %449 = vmatprep.subr.mxu0 0.0
    %450 = vmatpush1.xpose.msra.mxu0 0.0
    %451 = vmatprep.subr.mxu0 0.0
    %452 = vmatpush1.xpose.msra.mxu0 0.0
    %453 = vmatprep.subr.mxu0 0.0
    %454 = vmatpush1.xpose.msra.mxu0 0.0
    %455 = vmatprep.subr.mxu0 0.0
    %456 = vmatpush1.xpose.msra.mxu0 0.0
    %457 = vmatprep.subr.mxu0 0.0
    %458 = vmatpush1.xpose.msra.mxu0 0.0
    %459 = vmatprep.subr.mxu0 0.0
    %460 = vmatpush1.xpose.msra.mxu0 0.0
    %461 = vmatprep.subr.mxu0 0.0
    %462 = vmatpush1.xpose.msra.mxu0 0.0
    %463 = vmatprep.mubr.f32.mxu0 0.0
    %464 = vmatmul.mubr.f32.gmra.mrb[0].mxu0 %v388
    %v465 = vpop.f32.mrb[0].mxu0
    %v466 = vadd.f32 %v120, %v465
    %v467 = vpop.f32.mrb[0].mxu0
    %468 = vmatprep.mubr.f32.mxu0 0.0
    %469 = vmatmul.mubr.f32.gmra.mrb[0].mxu0 %v391
    %v470 = vpop.f32.mrb[0].mxu0
    %v471 = vadd.f32 %v121, %v470
    %v472 = vpop.f32.mrb[0].mxu0
    %473 = vdwg.mxu0
    %vm474 = vcmask 130048
    %v475 = vsel %vm474, %v466, -inf
    %476 = vmax.xlane.f32.xlu0 %v475
    %v477 = vpop.xlane.xlu0 %476
    %v478 = vsel %vm474, %v471, -inf
    %479 = vmax.xlane.f32.xlu0 %v478
    %v480 = vpop.xlane.xlu0 %479
    %v481 = vsub.f32 %v466, %v477
    %v482 = vsub.f32 %v471, %v480
    %v483 = vmul.f32 %v481, 1.442695
    %v484 = vpow.pop %v483
    %v485 = vmul.f32 %v482, 1.442695
    %v486 = vpow.pop %v485
    %v487 = vsel %vm474, %v484, 0.0
    %488 = vadd.xlane.f32.xlu0 %v487
    %v489 = vpop.xlane.xlu0 %488
    %v490 = vsel %vm474, %v486, 0.0
    %491 = vadd.xlane.f32.xlu0 %v490
    %v492 = vpop.xlane.xlu0 %491
    %v493 = vrcp.pop %v489
    %v494 = vrcp.pop %v492
    %v495 = vmul.f32 %v484, %v493
    %v496 = vmul.f32 %v486, %v494
    %v498 = vsel %vm474, %v495, 0
    %v501 = vsel %vm474, %v496, 0
    %503 = vmatprep.subr.mxu0 0.0
    %504 = vmatpush1.msra.mxu0 %v379
    %505 = vmatprep.subr.mxu0 0.0
    %506 = vmatpush1.msra.mxu0 %v384
    %507 = vmatprep.subr.mxu0 0.0
    %508 = vmatpush1.msra.mxu0 0.0
    %509 = vmatprep.subr.mxu0 0.0
    %510 = vmatpush1.msra.mxu0 0.0
    %511 = vmatprep.subr.mxu0 0.0
    %512 = vmatpush1.msra.mxu0 0.0
    %513 = vmatprep.subr.mxu0 0.0
    %514 = vmatpush1.msra.mxu0 0.0
    %515 = vmatprep.subr.mxu0 0.0
    %516 = vmatpush1.msra.mxu0 0.0
    %517 = vmatprep.subr.mxu0 0.0
    %518 = vmatpush1.msra.mxu0 0.0
    %519 = vmatprep.subr.mxu0 0.0
    %520 = vmatpush1.msra.mxu0 0.0
    %521 = vmatprep.subr.mxu0 0.0
    %522 = vmatpush1.msra.mxu0 0.0
    %523 = vmatprep.subr.mxu0 0.0
    %524 = vmatpush1.msra.mxu0 0.0
    %525 = vmatprep.subr.mxu0 0.0
    %526 = vmatpush1.msra.mxu0 0.0
    %527 = vmatprep.subr.mxu0 0.0
    %528 = vmatpush1.msra.mxu0 0.0
    %529 = vmatprep.subr.mxu0 0.0
    %530 = vmatpush1.msra.mxu0 0.0
    %531 = vmatprep.subr.mxu0 0.0
    %532 = vmatpush1.msra.mxu0 0.0
    %533 = vmatprep.subr.mxu0 0.0
    %534 = vmatpush1.msra.mxu0 0.0
    %535 = vmatprep.subr.mxu0 0.0
    %536 = vmatpush1.msra.mxu0 0.0
    %537 = vmatprep.subr.mxu0 0.0
    %538 = vmatpush1.msra.mxu0 0.0
    %539 = vmatprep.subr.mxu0 0.0
    %540 = vmatpush1.msra.mxu0 0.0
    %541 = vmatprep.subr.mxu0 0.0
    %542 = vmatpush1.msra.mxu0 0.0
    %543 = vmatprep.subr.mxu0 0.0
    %544 = vmatpush1.msra.mxu0 0.0
    %545 = vmatprep.subr.mxu0 0.0
    %546 = vmatpush1.msra.mxu0 0.0
    %547 = vmatprep.subr.mxu0 0.0
    %548 = vmatpush1.msra.mxu0 0.0
    %549 = vmatprep.subr.mxu0 0.0
    %550 = vmatpush1.msra.mxu0 0.0
    %551 = vmatprep.subr.mxu0 0.0
    %552 = vmatpush1.msra.mxu0 0.0
    %553 = vmatprep.subr.mxu0 0.0
    %554 = vmatpush1.msra.mxu0 0.0
    %555 = vmatprep.subr.mxu0 0.0
    %556 = vmatpush1.msra.mxu0 0.0
    %557 = vmatprep.subr.mxu0 0.0
    %558 = vmatpush1.msra.mxu0 0.0
    %559 = vmatprep.subr.mxu0 0.0
    %560 = vmatpush1.msra.mxu0 0.0
    %561 = vmatprep.subr.mxu0 0.0
    %562 = vmatpush1.msra.mxu0 0.0
    %563 = vmatprep.subr.mxu0 0.0
    %564 = vmatpush1.msra.mxu0 0.0
    %565 = vmatprep.subr.mxu0 0.0
    %566 = vmatpush1.msra.mxu0 0.0
    %567 = vmatprep.mubr.f32.mxu0 0.0
    %568 = vmatmul.mubr.f32.gmra.mrb[0].mxu0 %v498
    %v569 = vpop.f32.mrb[0].mxu0
    %v570 = vadd.f32 0.0, %v569
    %v571 = vpop.f32.mrb[0].mxu0
    %572 = vmatprep.mubr.f32.mxu0 0.0
    %573 = vmatmul.mubr.f32.gmra.mrb[0].mxu0 %v501
    %v574 = vpop.f32.mrb[0].mxu0
    %v575 = vadd.f32 0.0, %v574
    %v576 = vpop.f32.mrb[0].mxu0
    %577 = vdwg.mxu0
    %v578 = vld [vmem:[#allocation7] sm:$0xff]
    %v579 = vld [vmem:[#allocation7 + $0x8] sm:$0xff]
    %v580 = vld [vmem:[#allocation7 + $0x10] sm:$0xff]
    %v581 = vld [vmem:[#allocation7 + $0x18] sm:$0xff]
    %v582 = vld [vmem:[%s10] sm:$0x1]
    %v584 = vlaneseq
    %v585 = vshrl.u32 %v584, 7
    %v586 = vsub.s32 0, %v585
    %v587 = vrot.slane %v582, %v586
    %v590 = vsel %vm133, %v570, 0
    %v593 = vsel %vm133, %v575, 0
    %595 = vmatprep.subr.mxu0 0.0
    %596 = vmatpush1.msra.mxu0 %v578
    %597 = vmatprep.subr.mxu0 0.0
    %598 = vmatpush1.msra.mxu0 %v579
    %599 = vmatprep.subr.mxu0 0.0
    %600 = vmatpush1.msra.mxu0 %v580
    %601 = vmatprep.subr.mxu0 0.0
    %602 = vmatpush1.msra.mxu0 %v581
    %603 = vmatprep.subr.mxu0 0.0
    %604 = vmatpush1.msra.mxu0 0.0
    %605 = vmatprep.subr.mxu0 0.0
    %606 = vmatpush1.msra.mxu0 0.0
    %607 = vmatprep.subr.mxu0 0.0
    %608 = vmatpush1.msra.mxu0 0.0
    %609 = vmatprep.subr.mxu0 0.0
    %610 = vmatpush1.msra.mxu0 0.0
    %611 = vmatprep.subr.mxu0 0.0
    %612 = vmatpush1.msra.mxu0 0.0
    %613 = vmatprep.subr.mxu0 0.0
    %614 = vmatpush1.msra.mxu0 0.0
    %615 = vmatprep.subr.mxu0 0.0
    %616 = vmatpush1.msra.mxu0 0.0
    %617 = vmatprep.subr.mxu0 0.0
    %618 = vmatpush1.msra.mxu0 0.0
    %619 = vmatprep.subr.mxu0 0.0
    %620 = vmatpush1.msra.mxu0 0.0
    %621 = vmatprep.subr.mxu0 0.0
    %622 = vmatpush1.msra.mxu0 0.0
    %623 = vmatprep.subr.mxu0 0.0
    %624 = vmatpush1.msra.mxu0 0.0
    %625 = vmatprep.subr.mxu0 0.0
    %626 = vmatpush1.msra.mxu0 0.0
    %627 = vmatprep.subr.mxu0 0.0
    %628 = vmatpush1.msra.mxu0 0.0
    %629 = vmatprep.subr.mxu0 0.0
    %630 = vmatpush1.msra.mxu0 0.0
    %631 = vmatprep.subr.mxu0 0.0
    %632 = vmatpush1.msra.mxu0 0.0
    %633 = vmatprep.subr.mxu0 0.0
    %634 = vmatpush1.msra.mxu0 0.0
    %635 = vmatprep.subr.mxu0 0.0
    %636 = vmatpush1.msra.mxu0 0.0
    %637 = vmatprep.subr.mxu0 0.0
    %638 = vmatpush1.msra.mxu0 0.0
    %639 = vmatprep.subr.mxu0 0.0
    %640 = vmatpush1.msra.mxu0 0.0
    %641 = vmatprep.subr.mxu0 0.0
    %642 = vmatpush1.msra.mxu0 0.0
    %643 = vmatprep.subr.mxu0 0.0
    %644 = vmatpush1.msra.mxu0 0.0
    %645 = vmatprep.subr.mxu0 0.0
    %646 = vmatpush1.msra.mxu0 0.0
    %647 = vmatprep.subr.mxu0 0.0
    %648 = vmatpush1.msra.mxu0 0.0
    %649 = vmatprep.subr.mxu0 0.0
    %650 = vmatpush1.msra.mxu0 0.0
    %651 = vmatprep.subr.mxu0 0.0
    %652 = vmatpush1.msra.mxu0 0.0
    %653 = vmatprep.subr.mxu0 0.0
    %654 = vmatpush1.msra.mxu0 0.0
    %655 = vmatprep.subr.mxu0 0.0
    %656 = vmatpush1.msra.mxu0 0.0
    %657 = vmatprep.subr.mxu0 0.0
    %658 = vmatpush1.msra.mxu0 0.0
    %659 = vmatprep.mubr.f32.mxu0 0.0
    %660 = vmatmul.mubr.f32.gmra.mrb[0].mxu0 %v590
    %v661 = vpop.f32.mrb[0].mxu0
    %v662 = vadd.f32 %v587, %v661
    %v663 = vpop.f32.mrb[0].mxu0
    %664 = vmatprep.mubr.f32.mxu0 0.0
    %665 = vmatmul.mubr.f32.gmra.mrb[0].mxu0 %v593
    %v666 = vpop.f32.mrb[0].mxu0
    %v667 = vadd.f32 %v587, %v666
    %v668 = vpop.f32.mrb[0].mxu0
    %669 = vdwg.mxu0
    %v670 = vadd.f32 %v118, %v662
    %v671 = vadd.f32 %v119, %v667
    %v672 = vld [vmem:[%s11] sm:$0x1]
    %v673 = vld [vmem:[%s12] sm:$0x1]
    %v674 = vsel %vm133, %v670, 0.0
    %675 = vadd.xlane.f32.xlu0 %v674
    %v676 = vpop.xlane.xlu0 %675
    %v677 = vsel %vm133, %v671, 0.0
    %678 = vadd.xlane.f32.xlu0 %v677
    %v679 = vpop.xlane.xlu0 %678
    %v680 = vrcp.pop 32.0
    %v681 = vmul.f32 %v676, %v680
    %v682 = vmul.f32 %v679, %v680
    %v683 = vsub.f32 %v670, %v681
    %v684 = vsub.f32 %v671, %v682
    %v685 = vmul.f32 %v683, %v683
    %v686 = vmul.f32 %v684, %v684
    %v687 = vsel %vm133, %v685, 0.0
    %688 = vadd.xlane.f32.xlu0 %v687
    %v689 = vpop.xlane.xlu0 %688
    %v690 = vsel %vm133, %v686, 0.0
    %691 = vadd.xlane.f32.xlu0 %v690
    %v692 = vpop.xlane.xlu0 %691
    %v693 = vmul.f32 %v689, %v680
    %v694 = vmul.f32 %v692, %v680
    %v695 = vadd.f32 %v693, 1e-12
    %v696 = vadd.f32 %v694, 1e-12
    %v697 = vrsqrt.pop %v695
    %v698 = vrsqrt.pop %v696
    %v699 = vmul.f32 %v683, %v697
    %v700 = vmul.f32 %v684, %v698
    %v702 = vlaneseq
    %v703 = vshrl.u32 %v702, 7
    %v704 = vsub.s32 0, %v703
    %v705 = vrot.slane %v672, %v704
    %v707 = vmul.f32 %v699, %v705
    %v708 = vmul.f32 %v700, %v705
    %v710 = vlaneseq
    %v711 = vshrl.u32 %v710, 7
    %v712 = vsub.s32 0, %v711
    %v713 = vrot.slane %v673, %v712
    %v715 = vadd.f32 %v707, %v713
    %v716 = vadd.f32 %v708, %v713
    %v717 = vld [vmem:[#allocation8] sm:$0xff]
    %v718 = vld [vmem:[#allocation8 + $0x8] sm:$0xff]
    %v719 = vld [vmem:[#allocation8 + $0x10] sm:$0xff]
    %v720 = vld [vmem:[#allocation8 + $0x18] sm:$0xff]
    %v721 = vld [vmem:[%s14] sm:$0x1]
    %v723 = vlaneseq
    %v724 = vshrl.u32 %v723, 7
    %v725 = vsub.s32 0, %v724
    %v726 = vrot.slane %v721, %v725
    %v729 = vsel %vm133, %v715, 0
    %v732 = vsel %vm133, %v716, 0
    %734 = vmatprep.subr.mxu0 0.0
    %735 = vmatpush1.msra.mxu0 %v717
    %736 = vmatprep.subr.mxu0 0.0
    %737 = vmatpush1.msra.mxu0 %v718
    %738 = vmatprep.subr.mxu0 0.0
    %739 = vmatpush1.msra.mxu0 %v719
    %740 = vmatprep.subr.mxu0 0.0
    %741 = vmatpush1.msra.mxu0 %v720
    %742 = vmatprep.subr.mxu0 0.0
    %743 = vmatpush1.msra.mxu0 0.0
    %744 = vmatprep.subr.mxu0 0.0
    %745 = vmatpush1.msra.mxu0 0.0
    %746 = vmatprep.subr.mxu0 0.0
    %747 = vmatpush1.msra.mxu0 0.0
    %748 = vmatprep.subr.mxu0 0.0
    %749 = vmatpush1.msra.mxu0 0.0
    %750 = vmatprep.subr.mxu0 0.0
    %751 = vmatpush1.msra.mxu0 0.0
    %752 = vmatprep.subr.mxu0 0.0
    %753 = vmatpush1.msra.mxu0 0.0
    %754 = vmatprep.subr.mxu0 0.0
    %755 = vmatpush1.msra.mxu0 0.0
    %756 = vmatprep.subr.mxu0 0.0
    %757 = vmatpush1.msra.mxu0 0.0
    %758 = vmatprep.subr.mxu0 0.0
    %759 = vmatpush1.msra.mxu0 0.0
    %760 = vmatprep.subr.mxu0 0.0
    %761 = vmatpush1.msra.mxu0 0.0
    %762 = vmatprep.subr.mxu0 0.0
    %763 = vmatpush1.msra.mxu0 0.0
    %764 = vmatprep.subr.mxu0 0.0
    %765 = vmatpush1.msra.mxu0 0.0
    %766 = vmatprep.subr.mxu0 0.0
    %767 = vmatpush1.msra.mxu0 0.0
    %768 = vmatprep.subr.mxu0 0.0
    %769 = vmatpush1.msra.mxu0 0.0
    %770 = vmatprep.subr.mxu0 0.0
    %771 = vmatpush1.msra.mxu0 0.0
    %772 = vmatprep.subr.mxu0 0.0
    %773 = vmatpush1.msra.mxu0 0.0
    %774 = vmatprep.subr.mxu0 0.0
    %775 = vmatpush1.msra.mxu0 0.0
    %776 = vmatprep.subr.mxu0 0.0
    %777 = vmatpush1.msra.mxu0 0.0
    %778 = vmatprep.subr.mxu0 0.0
    %779 = vmatpush1.msra.mxu0 0.0
    %780 = vmatprep.subr.mxu0 0.0
    %781 = vmatpush1.msra.mxu0 0.0
    %782 = vmatprep.subr.mxu0 0.0
    %783 = vmatpush1.msra.mxu0 0.0
    %784 = vmatprep.subr.mxu0 0.0
    %785 = vmatpush1.msra.mxu0 0.0
    %786 = vmatprep.subr.mxu0 0.0
    %787 = vmatpush1.msra.mxu0 0.0
    %788 = vmatprep.subr.mxu0 0.0
    %789 = vmatpush1.msra.mxu0 0.0
    %790 = vmatprep.subr.mxu0 0.0
    %791 = vmatpush1.msra.mxu0 0.0
    %792 = vmatprep.subr.mxu0 0.0
    %793 = vmatpush1.msra.mxu0 0.0
    %794 = vmatprep.subr.mxu0 0.0
    %795 = vmatpush1.msra.mxu0 0.0
    %796 = vmatprep.subr.mxu0 0.0
    %797 = vmatpush1.msra.mxu0 0.0
    %798 = vmatprep.mubr.f32.mxu0 0.0
    %799 = vmatmul.mubr.f32.gmra.mrb[0].mxu0 %v729
    %v800 = vpop.f32.mrb[0].mxu0
    %v801 = vadd.f32 %v726, %v800
    %v802 = vpop.f32.mrb[0].mxu0
    %803 = vmatprep.mubr.f32.mxu0 0.0
    %804 = vmatmul.mubr.f32.gmra.mrb[0].mxu0 %v732
    %v805 = vpop.f32.mrb[0].mxu0
    %v806 = vadd.f32 %v726, %v805
    %v807 = vpop.f32.mrb[0].mxu0
    %808 = vdwg.mxu0
    %v809 = vmul.f32 %v801, %v801
    %v810 = vmul.f32 %v806, %v806
    %v811 = vmul.f32 %v801, %v809
    %v812 = vmul.f32 %v806, %v810
    %v813 = vmul.f32 %v811, 0.044715
    %v814 = vmul.f32 %v812, 0.044715
    %v815 = vadd.f32 %v801, %v813
    %v816 = vadd.f32 %v806, %v814
    %v817 = vmul.f32 %v815, 0.7978846
    %v818 = vmul.f32 %v816, 0.7978846
    %v819 = vtanh.pop %v817
    %v820 = vtanh.pop %v818
    %v821 = vadd.f32 %v819, 1.0
    %v822 = vadd.f32 %v820, 1.0
    %v823 = vmul.f32 %v821, 0.5
    %v824 = vmul.f32 %v822, 0.5
    %v825 = vmul.f32 %v801, %v823
    %v826 = vmul.f32 %v806, %v824
    %v827 = vld [vmem:[%s15] sm:$0xff]
    %v828 = vld [vmem:[%s15 + $0x8] sm:$0xff]
    %v829 = vld [vmem:[%s15 + $0x10] sm:$0xff]
    %v830 = vld [vmem:[%s15 + $0x18] sm:$0xff]
    %v831 = vld [vmem:[%s15 + $0x20] sm:$0xff]
    %v832 = vld [vmem:[%s15 + $0x28] sm:$0xff]
    %v833 = vld [vmem:[%s15 + $0x30] sm:$0xff]
    %v834 = vld [vmem:[%s15 + $0x38] sm:$0xff]
    %v835 = vld [vmem:[%s16] sm:$0x1]
    %v837 = vlaneseq
    %v838 = vshrl.u32 %v837, 7
    %v839 = vsub.s32 0, %v838
    %v840 = vrot.slane %v835, %v839
    %vm842 = vcmask 523264
    %v844 = vsel %vm842, %v825, 0
    %v847 = vsel %vm842, %v826, 0
    %849 = vmatprep.subr.mxu0 0.0
    %850 = vmatpush1.msra.mxu0 %v827
    %851 = vmatprep.subr.mxu0 0.0
    %852 = vmatpush1.msra.mxu0 %v828
    %853 = vmatprep.subr.mxu0 0.0
    %854 = vmatpush1.msra.mxu0 %v829
    %855 = vmatprep.subr.mxu0 0.0
    %856 = vmatpush1.msra.mxu0 %v830
    %857 = vmatprep.subr.mxu0 0.0
    %858 = vmatpush1.msra.mxu0 %v831
    %859 = vmatprep.subr.mxu0 0.0
    %860 = vmatpush1.msra.mxu0 %v832
    %861 = vmatprep.subr.mxu0 0.0
    %862 = vmatpush1.msra.mxu0 %v833
    %863 = vmatprep.subr.mxu0 0.0
    %864 = vmatpush1.msra.mxu0 %v834
    %865 = vmatprep.subr.mxu0 0.0
    %866 = vmatpush1.msra.mxu0 0.0
    %867 = vmatprep.subr.mxu0 0.0
    %868 = vmatpush1.msra.mxu0 0.0
    %869 = vmatprep.subr.mxu0 0.0
    %870 = vmatpush1.msra.mxu0 0.0
    %871 = vmatprep.subr.mxu0 0.0
    %872 = vmatpush1.msra.mxu0 0.0
    %873 = vmatprep.subr.mxu0 0.0
    %874 = vmatpush1.msra.mxu0 0.0
    %875 = vmatprep.subr.mxu0 0.0
    %876 = vmatpush1.msra.mxu0 0.0
    %877 = vmatprep.subr.mxu0 0.0
    %878 = vmatpush1.msra.mxu0 0.0
    %879 = vmatprep.subr.mxu0 0.0
    %880 = vmatpush1.msra.mxu0 0.0
    %881 = vmatprep.subr.mxu0 0.0
    %882 = vmatpush1.msra.mxu0 0.0
    %883 = vmatprep.subr.mxu0 0.0
    %884 = vmatpush1.msra.mxu0 0.0
    %885 = vmatprep.subr.mxu0 0.0
    %886 = vmatpush1.msra.mxu0 0.0
    %887 = vmatprep.subr.mxu0 0.0
    %888 = vmatpush1.msra.mxu0 0.0
    %889 = vmatprep.subr.mxu0 0.0
    %890 = vmatpush1.msra.mxu0 0.0
    %891 = vmatprep.subr.mxu0 0.0
    %892 = vmatpush1.msra.mxu0 0.0
    %893 = vmatprep.subr.mxu0 0.0
    %894 = vmatpush1.msra.mxu0 0.0
    %895 = vmatprep.subr.mxu0 0.0
    %896 = vmatpush1.msra.mxu0 0.0
    %897 = vmatprep.subr.mxu0 0.0
    %898 = vmatpush1.msra.mxu0 0.0
    %899 = vmatprep.subr.mxu0 0.0
    %900 = vmatpush1.msra.mxu0 0.0
    %901 = vmatprep.subr.mxu0 0.0
    %902 = vmatpush1.msra.mxu0 0.0
    %903 = vmatprep.subr.mxu0 0.0
    %904 = vmatpush1.msra.mxu0 0.0
    %905 = vmatprep.subr.mxu0 0.0
    %906 = vmatpush1.msra.mxu0 0.0
    %907 = vmatprep.subr.mxu0 0.0
    %908 = vmatpush1.msra.mxu0 0.0
    %909 = vmatprep.subr.mxu0 0.0
    %910 = vmatpush1.msra.mxu0 0.0
    %911 = vmatprep.subr.mxu0 0.0
    %912 = vmatpush1.msra.mxu0 0.0
    %913 = vmatprep.mubr.f32.mxu0 0.0
    %914 = vmatmul.mubr.f32.gmra.mrb[0].mxu0 %v844
    %v915 = vpop.f32.mrb[0].mxu0
    %v916 = vadd.f32 %v840, %v915
    %v917 = vpop.f32.mrb[0].mxu0
    %918 = vmatprep.mubr.f32.mxu0 0.0
    %919 = vmatmul.mubr.f32.gmra.mrb[0].mxu0 %v847
    %v920 = vpop.f32.mrb[0].mxu0
    %v921 = vadd.f32 %v840, %v920
    %v922 = vpop.f32.mrb[0].mxu0
    %923 = vdwg.mxu0
    %v924 = vadd.f32 %v715, %v916
    %v925 = vadd.f32 %v716, %v921
    %v926 = vld [vmem:[%s17] sm:$0x1]
    %v927 = vld [vmem:[%s18] sm:$0x1]
    %v928 = vsel %vm133, %v924, 0.0
    %929 = vadd.xlane.f32.xlu0 %v928
    %v930 = vpop.xlane.xlu0 %929
    %v931 = vsel %vm133, %v925, 0.0
    %932 = vadd.xlane.f32.xlu0 %v931
    %v933 = vpop.xlane.xlu0 %932
    %v934 = vmul.f32 %v930, %v680
    %v935 = vmul.f32 %v933, %v680
    %v936 = vsub.f32 %v924, %v934
    %v937 = vsub.f32 %v925, %v935
    %v938 = vmul.f32 %v936, %v936
    %v939 = vmul.f32 %v937, %v937
    %v940 = vsel %vm133, %v938, 0.0
    %941 = vadd.xlane.f32.xlu0 %v940
    %v942 = vpop.xlane.xlu0 %941
    %v943 = vsel %vm133, %v939, 0.0
    %944 = vadd.xlane.f32.xlu0 %v943
    %v945 = vpop.xlane.xlu0 %944
    %v946 = vmul.f32 %v942, %v680
    %v947 = vmul.f32 %v945, %v680
    %v948 = vadd.f32 %v946, 1e-12
    %v949 = vadd.f32 %v947, 1e-12
    %v950 = vrsqrt.pop %v948
    %v951 = vrsqrt.pop %v949
    %v952 = vmul.f32 %v936, %v950
    %v953 = vmul.f32 %v937, %v951
    %v955 = vlaneseq
    %v956 = vshrl.u32 %v955, 7
    %v957 = vsub.s32 0, %v956
    %v958 = vrot.slane %v926, %v957
    %v960 = vmul.f32 %v952, %v958
    %v961 = vmul.f32 %v953, %v958
    %v963 = vlaneseq
    %v964 = vshrl.u32 %v963, 7
    %v965 = vsub.s32 0, %v964
    %v966 = vrot.slane %v927, %v965
    %v968 = vadd.f32 %v960, %v966
    %v969 = vadd.f32 %v961, %v966
    %s970 = scalar_lea.vmem %s3, 32
    %v971 = vld [vmem:[%s970] sm:$0xff]
    %v972 = vld [vmem:[%s970 + $0x8] sm:$0xff]
    %v973 = vld [vmem:[%s970 + $0x10] sm:$0xff]
    %v974 = vld [vmem:[%s970 + $0x18] sm:$0xff]
    %s975 = scalar_lea.vmem %s4, 1
    %v976 = vld [vmem:[%s975] sm:$0x1]
    %v978 = vlaneseq
    %v979 = vshrl.u32 %v978, 7
    %v980 = vsub.s32 0, %v979
    %v981 = vrot.slane %v976, %v980
    %v984 = vsel %vm133, %v968, 0
    %v987 = vsel %vm133, %v969, 0
    %989 = vmatprep.subr.mxu0 0.0
    %990 = vmatpush1.msra.mxu0 %v971
    %991 = vmatprep.subr.mxu0 0.0
    %992 = vmatpush1.msra.mxu0 %v972
    %993 = vmatprep.subr.mxu0 0.0
    %994 = vmatpush1.msra.mxu0 %v973
    %995 = vmatprep.subr.mxu0 0.0
    %996 = vmatpush1.msra.mxu0 %v974
    %997 = vmatprep.subr.mxu0 0.0
    %998 = vmatpush1.msra.mxu0 0.0
    %999 = vmatprep.subr.mxu0 0.0
    %1000 = vmatpush1.msra.mxu0 0.0
    %1001 = vmatprep.subr.mxu0 0.0
    %1002 = vmatpush1.msra.mxu0 0.0
    %1003 = vmatprep.subr.mxu0 0.0
    %1004 = vmatpush1.msra.mxu0 0.0
    %1005 = vmatprep.subr.mxu0 0.0
    %1006 = vmatpush1.msra.mxu0 0.0
    %1007 = vmatprep.subr.mxu0 0.0
    %1008 = vmatpush1.msra.mxu0 0.0
    %1009 = vmatprep.subr.mxu0 0.0
    %1010 = vmatpush1.msra.mxu0 0.0
    %1011 = vmatprep.subr.mxu0 0.0
    %1012 = vmatpush1.msra.mxu0 0.0
    %1013 = vmatprep.subr.mxu0 0.0
    %1014 = vmatpush1.msra.mxu0 0.0
    %1015 = vmatprep.subr.mxu0 0.0
    %1016 = vmatpush1.msra.mxu0 0.0
    %1017 = vmatprep.subr.mxu0 0.0
    %1018 = vmatpush1.msra.mxu0 0.0
    %1019 = vmatprep.subr.mxu0 0.0
    %1020 = vmatpush1.msra.mxu0 0.0
    %1021 = vmatprep.subr.mxu0 0.0
    %1022 = vmatpush1.msra.mxu0 0.0
    %1023 = vmatprep.subr.mxu0 0.0
    %1024 = vmatpush1.msra.mxu0 0.0
    %1025 = vmatprep.subr.mxu0 0.0
    %1026 = vmatpush1.msra.mxu0 0.0
    %1027 = vmatprep.subr.mxu0 0.0
    %1028 = vmatpush1.msra.mxu0 0.0
    %1029 = vmatprep.subr.mxu0 0.0
    %1030 = vmatpush1.msra.mxu0 0.0
    %1031 = vmatprep.subr.mxu0 0.0
    %1032 = vmatpush1.msra.mxu0 0.0
    %1033 = vmatprep.subr.mxu0 0.0
    %1034 = vmatpush1.msra.mxu0 0.0
    %1035 = vmatprep.subr.mxu0 0.0
    %1036 = vmatpush1.msra.mxu0 0.0
    %1037 = vmatprep.subr.mxu0 0.0
    %1038 = vmatpush1.msra.mxu0 0.0
    %1039 = vmatprep.subr.mxu0 0.0
    %1040 = vmatpush1.msra.mxu0 0.0
    %1041 = vmatprep.subr.mxu0 0.0
    %1042 = vmatpush1.msra.mxu0 0.0
    %1043 = vmatprep.subr.mxu0 0.0
    %1044 = vmatpush1.msra.mxu0 0.0
    %1045 = vmatprep.subr.mxu0 0.0
    %1046 = vmatpush1.msra.mxu0 0.0
    %1047 = vmatprep.subr.mxu0 0.0
    %1048 = vmatpush1.msra.mxu0 0.0
    %1049 = vmatprep.subr.mxu0 0.0
    %1050 = vmatpush1.msra.mxu0 0.0
    %1051 = vmatprep.subr.mxu0 0.0
    %1052 = vmatpush1.msra.mxu0 0.0
    %1053 = vmatprep.mubr.f32.mxu0 0.0
    %1054 = vmatmul.mubr.f32.gmra.mrb[0].mxu0 %v984
    %v1055 = vpop.f32.mrb[0].mxu0
    %v1056 = vadd.f32 %v981, %v1055
    %v1057 = vpop.f32.mrb[0].mxu0
    %1058 = vmatprep.mubr.f32.mxu0 0.0
    %1059 = vmatmul.mubr.f32.gmra.mrb[0].mxu0 %v987
    %v1060 = vpop.f32.mrb[0].mxu0
    %v1061 = vadd.f32 %v981, %v1060
    %v1062 = vpop.f32.mrb[0].mxu0
    %1063 = vdwg.mxu0
    %s1064 = scalar_lea.vmem %s5, 32
    %v1065 = vld [vmem:[%s1064] sm:$0xff]
    %v1066 = vld [vmem:[%s1064 + $0x8] sm:$0xff]
    %v1067 = vld [vmem:[%s1064 + $0x10] sm:$0xff]
    %v1068 = vld [vmem:[%s1064 + $0x18] sm:$0xff]
    %s1069 = scalar_lea.vmem %s6, 1
    %v1070 = vld [vmem:[%s1069] sm:$0x1]
    %v1072 = vlaneseq
    %v1073 = vshrl.u32 %v1072, 7
    %v1074 = vsub.s32 0, %v1073
    %v1075 = vrot.slane %v1070, %v1074
    %1077 = vmatprep.subr.mxu0 0.0
    %1078 = vmatpush1.msra.mxu0 %v1065
    %1079 = vmatprep.subr.mxu0 0.0
    %1080 = vmatpush1.msra.mxu0 %v1066
    %1081 = vmatprep.subr.mxu0 0.0
    %1082 = vmatpush1.msra.mxu0 %v1067
    %1083 = vmatprep.subr.mxu0 0.0
    %1084 = vmatpush1.msra.mxu0 %v1068
    %1085 = vmatprep.subr.mxu0 0.0
    %1086 = vmatpush1.msra.mxu0 0.0
    %1087 = vmatprep.subr.mxu0 0.0
    %1088 = vmatpush1.msra.mxu0 0.0
    %1089 = vmatprep.subr.mxu0 0.0
    %1090 = vmatpush1.msra.mxu0 0.0
    %1091 = vmatprep.subr.mxu0 0.0
    %1092 = vmatpush1.msra.mxu0 0.0
    %1093 = vmatprep.subr.mxu0 0.0
    %1094 = vmatpush1.msra.mxu0 0.0
    %1095 = vmatprep.subr.mxu0 0.0
    %1096 = vmatpush1.msra.mxu0 0.0
    %1097 = vmatprep.subr.mxu0 0.0
    %1098 = vmatpush1.msra.mxu0 0.0
    %1099 = vmatprep.subr.mxu0 0.0
    %1100 = vmatpush1.msra.mxu0 0.0
    %1101 = vmatprep.subr.mxu0 0.0
    %1102 = vmatpush1.msra.mxu0 0.0
    %1103 = vmatprep.subr.mxu0 0.0
    %1104 = vmatpush1.msra.mxu0 0.0
    %1105 = vmatprep.subr.mxu0 0.0
    %1106 = vmatpush1.msra.mxu0 0.0
    %1107 = vmatprep.subr.mxu0 0.0
    %1108 = vmatpush1.msra.mxu0 0.0
    %1109 = vmatprep.subr.mxu0 0.0
    %1110 = vmatpush1.msra.mxu0 0.0
    %1111 = vmatprep.subr.mxu0 0.0
    %1112 = vmatpush1.msra.mxu0 0.0
    %1113 = vmatprep.subr.mxu0 0.0
    %1114 = vmatpush1.msra.mxu0 0.0
    %1115 = vmatprep.subr.mxu0 0.0
    %1116 = vmatpush1.msra.mxu0 0.0
    %1117 = vmatprep.subr.mxu0 0.0
    %1118 = vmatpush1.msra.mxu0 0.0
    %1119 = vmatprep.subr.mxu0 0.0
    %1120 = vmatpush1.msra.mxu0 0.0
    %1121 = vmatprep.subr.mxu0 0.0
    %1122 = vmatpush1.msra.mxu0 0.0
    %1123 = vmatprep.subr.mxu0 0.0
    %1124 = vmatpush1.msra.mxu0 0.0
    %1125 = vmatprep.subr.mxu0 0.0
    %1126 = vmatpush1.msra.mxu0 0.0
    %1127 = vmatprep.subr.mxu0 0.0
    %1128 = vmatpush1.msra.mxu0 0.0
    %1129 = vmatprep.subr.mxu0 0.0
    %1130 = vmatpush1.msra.mxu0 0.0
    %1131 = vmatprep.subr.mxu0 0.0
    %1132 = vmatpush1.msra.mxu0 0.0
    %1133 = vmatprep.subr.mxu0 0.0
    %1134 = vmatpush1.msra.mxu0 0.0
    %1135 = vmatprep.subr.mxu0 0.0
    %1136 = vmatpush1.msra.mxu0 0.0
    %1137 = vmatprep.subr.mxu0 0.0
    %1138 = vmatpush1.msra.mxu0 0.0
    %1139 = vmatprep.subr.mxu0 0.0
    %1140 = vmatpush1.msra.mxu0 0.0
    %1141 = vmatprep.mubr.f32.mxu0 0.0
    %1142 = vmatmul.mubr.f32.gmra.mrb[0].mxu0 %v984
    %v1143 = vpop.f32.mrb[0].mxu0
    %v1144 = vadd.f32 %v1075, %v1143
    %v1145 = vpop.f32.mrb[0].mxu0
    %1146 = vmatprep.mubr.f32.mxu0 0.0
    %1147 = vmatmul.mubr.f32.gmra.mrb[0].mxu0 %v987
    %v1148 = vpop.f32.mrb[0].mxu0
    %v1149 = vadd.f32 %v1075, %v1148
    %v1150 = vpop.f32.mrb[0].mxu0
    %1151 = vdwg.mxu0
    %s1152 = scalar_lea.vmem %s7, 32
    %v1153 = vld [vmem:[%s1152] sm:$0xff]
    %v1154 = vld [vmem:[%s1152 + $0x8] sm:$0xff]
    %v1155 = vld [vmem:[%s1152 + $0x10] sm:$0xff]
    %v1156 = vld [vmem:[%s1152 + $0x18] sm:$0xff]
    %s1157 = scalar_lea.vmem %s8, 1
    %v1158 = vld [vmem:[%s1157] sm:$0x1]
    %v1160 = vlaneseq
    %v1161 = vshrl.u32 %v1160, 7
    %v1162 = vsub.s32 0, %v1161
    %v1163 = vrot.slane %v1158, %v1162
    %1165 = vmatprep.subr.mxu0 0.0
    %1166 = vmatpush1.msra.mxu0 %v1153
    %1167 = vmatprep.subr.mxu0 0.0
    %1168 = vmatpush1.msra.mxu0 %v1154
    %1169 = vmatprep.subr.mxu0 0.0
    %1170 = vmatpush1.msra.mxu0 %v1155
    %1171 = vmatprep.subr.mxu0 0.0
    %1172 = vmatpush1.msra.mxu0 %v1156
    %1173 = vmatprep.subr.mxu0 0.0
    %1174 = vmatpush1.msra.mxu0 0.0
    %1175 = vmatprep.subr.mxu0 0.0
    %1176 = vmatpush1.msra.mxu0 0.0
    %1177 = vmatprep.subr.mxu0 0.0
    %1178 = vmatpush1.msra.mxu0 0.0
    %1179 = vmatprep.subr.mxu0 0.0
    %1180 = vmatpush1.msra.mxu0 0.0
    %1181 = vmatprep.subr.mxu0 0.0
    %1182 = vmatpush1.msra.mxu0 0.0
    %1183 = vmatprep.subr.mxu0 0.0
    %1184 = vmatpush1.msra.mxu0 0.0
    %1185 = vmatprep.subr.mxu0 0.0
    %1186 = vmatpush1.msra.mxu0 0.0
    %1187 = vmatprep.subr.mxu0 0.0
    %1188 = vmatpush1.msra.mxu0 0.0
    %1189 = vmatprep.subr.mxu0 0.0
    %1190 = vmatpush1.msra.mxu0 0.0
    %1191 = vmatprep.subr.mxu0 0.0
    %1192 = vmatpush1.msra.mxu0 0.0
    %1193 = vmatprep.subr.mxu0 0.0
    %1194 = vmatpush1.msra.mxu0 0.0
    %1195 = vmatprep.subr.mxu0 0.0
    %1196 = vmatpush1.msra.mxu0 0.0
    %1197 = vmatprep.subr.mxu0 0.0
    %1198 = vmatpush1.msra.mxu0 0.0
    %1199 = vmatprep.subr.mxu0 0.0
    %1200 = vmatpush1.msra.mxu0 0.0
    %1201 = vmatprep.subr.mxu0 0.0
    %1202 = vmatpush1.msra.mxu0 0.0
    %1203 = vmatprep.subr.mxu0 0.0
    %1204 = vmatpush1.msra.mxu0 0.0
    %1205 = vmatprep.subr.mxu0 0.0
    %1206 = vmatpush1.msra.mxu0 0.0
    %1207 = vmatprep.subr.mxu0 0.0
    %1208 = vmatpush1.msra.mxu0 0.0
    %1209 = vmatprep.subr.mxu0 0.0
    %1210 = vmatpush1.msra.mxu0 0.0
    %1211 = vmatprep.subr.mxu0 0.0
    %1212 = vmatpush1.msra.mxu0 0.0
    %1213 = vmatprep.subr.mxu0 0.0
    %1214 = vmatpush1.msra.mxu0 0.0
    %1215 = vmatprep.subr.mxu0 0.0
    %1216 = vmatpush1.msra.mxu0 0.0
    %1217 = vmatprep.subr.mxu0 0.0
    %1218 = vmatpush1.msra.mxu0 0.0
    %1219 = vmatprep.subr.mxu0 0.0
    %1220 = vmatpush1.msra.mxu0 0.0
    %1221 = vmatprep.subr.mxu0 0.0
    %1222 = vmatpush1.msra.mxu0 0.0
    %1223 = vmatprep.subr.mxu0 0.0
    %1224 = vmatpush1.msra.mxu0 0.0
    %1225 = vmatprep.subr.mxu0 0.0
    %1226 = vmatpush1.msra.mxu0 0.0
    %1227 = vmatprep.subr.mxu0 0.0
    %1228 = vmatpush1.msra.mxu0 0.0
    %1229 = vmatprep.mubr.f32.mxu0 0.0
    %1230 = vmatmul.mubr.f32.gmra.mrb[0].mxu0 %v984
    %v1231 = vpop.f32.mrb[0].mxu0
    %v1232 = vadd.f32 %v1163, %v1231
    %v1233 = vpop.f32.mrb[0].mxu0
    %1234 = vmatprep.mubr.f32.mxu0 0.0
    %1235 = vmatmul.mubr.f32.gmra.mrb[0].mxu0 %v987
    %v1236 = vpop.f32.mrb[0].mxu0
    %v1237 = vadd.f32 %v1163, %v1236
    %v1238 = vpop.f32.mrb[0].mxu0
    %1239 = vdwg.mxu0
    %v1241 = vsel %vm133, %v1056, 0
    %v1244 = vsel %vm133, %v1061, 0
    %v1247 = vsel %vm133, %v1144, 0
    %v1250 = vsel %vm133, %v1149, 0
    %1252 = vmatprep.subr.mxu0 0.0
    %1253 = vmatpush1.xpose.msra.mxu0 %v1247
    %1254 = vmatprep.subr.mxu0 0.0
    %1255 = vmatpush1.xpose.msra.mxu0 %v1250
    %1256 = vmatprep.subr.mxu0 0.0
    %1257 = vmatpush1.xpose.msra.mxu0 0.0
    %1258 = vmatprep.subr.mxu0 0.0
    %1259 = vmatpush1.xpose.msra.mxu0 0.0
    %1260 = vmatprep.subr.mxu0 0.0
    %1261 = vmatpush1.xpose.msra.mxu0 0.0
    %1262 = vmatprep.subr.mxu0 0.0
    %1263 = vmatpush1.xpose.msra.mxu0 0.0
    %1264 = vmatprep.subr.mxu0 0.0
    %1265 = vmatpush1.xpose.msra.mxu0 0.0
    %1266 = vmatprep.subr.mxu0 0.0
    %1267 = vmatpush1.xpose.msra.mxu0 0.0
    %1268 = vmatprep.subr.mxu0 0.0
    %1269 = vmatpush1.xpose.msra.mxu0 0.0
    %1270 = vmatprep.subr.mxu0 0.0
    %1271 = vmatpush1.xpose.msra.mxu0 0.0
    %1272 = vmatprep.subr.mxu0 0.0
    %1273 = vmatpush1.xpose.msra.mxu0 0.0
    %1274 = vmatprep.subr.mxu0 0.0
    %1275 = vmatpush1.xpose.msra.mxu0 0.0
    %1276 = vmatprep.subr.mxu0 0.0
    %1277 = vmatpush1.xpose.msra.mxu0 0.0
    %1278 = vmatprep.subr.mxu0 0.0
    %1279 = vmatpush1.xpose.msra.mxu0 0.0
    %1280 = vmatprep.subr.mxu0 0.0
    %1281 = vmatpush1.xpose.msra.mxu0 0.0
    %1282 = vmatprep.subr.mxu0 0.0
    %1283 = vmatpush1.xpose.msra.mxu0 0.0
    %1284 = vmatprep.subr.mxu0 0.0
    %1285 = vmatpush1.xpose.msra.mxu0 0.0
    %1286 = vmatprep.subr.mxu0 0.0
    %1287 = vmatpush1.xpose.msra.mxu0 0.0
    %1288 = vmatprep.subr.mxu0 0.0
    %1289 = vmatpush1.xpose.msra.mxu0 0.0
    %1290 = vmatprep.subr.mxu0 0.0
    %1291 = vmatpush1.xpose.msra.mxu0 0.0
    %1292 = vmatprep.subr.mxu0 0.0
    %1293 = vmatpush1.xpose.msra.mxu0 0.0
    %1294 = vmatprep.subr.mxu0 0.0
    %1295 = vmatpush1.xpose.msra.mxu0 0.0
    %1296 = vmatprep.subr.mxu0 0.0
    %1297 = vmatpush1.xpose.msra.mxu0 0.0
    %1298 = vmatprep.subr.mxu0 0.0
    %1299 = vmatpush1.xpose.msra.mxu0 0.0
    %1300 = vmatprep.subr.mxu0 0.0
    %1301 = vmatpush1.xpose.msra.mxu0 0.0
    %1302 = vmatprep.subr.mxu0 0.0
    %1303 = vmatpush1.xpose.msra.mxu0 0.0
    %1304 = vmatprep.subr.mxu0 0.0
    %1305 = vmatpush1.xpose.msra.mxu0 0.0
    %1306 = vmatprep.subr.mxu0 0.0
    %1307 = vmatpush1.xpose.msra.mxu0 0.0
    %1308 = vmatprep.subr.mxu0 0.0
    %1309 = vmatpush1.xpose.msra.mxu0 0.0
    %1310 = vmatprep.subr.mxu0 0.0
    %1311 = vmatpush1.xpose.msra.mxu0 0.0
    %1312 = vmatprep.subr.mxu0 0.0
    %1313 = vmatpush1.xpose.msra.mxu0 0.0
    %1314 = vmatprep.subr.mxu0 0.0
    %1315 = vmatpush1.xpose.msra.mxu0 0.0
    %1316 = vmatprep.mubr.f32.mxu0 0.0
    %1317 = vmatmul.mubr.f32.gmra.mrb[0].mxu0 %v1241
    %v1318 = vpop.f32.mrb[0].mxu0
    %v1319 = vadd.f32 %v120, %v1318
    %v1320 = vpop.f32.mrb[0].mxu0
    %1321 = vmatprep.mubr.f32.mxu0 0.0
    %1322 = vmatmul.mubr.f32.gmra.mrb[0].mxu0 %v1244
    %v1323 = vpop.f32.mrb[0].mxu0
    %v1324 = vadd.f32 %v121, %v1323
    %v1325 = vpop.f32.mrb[0].mxu0
    %1326 = vdwg.mxu0
    %v1327 = vsel %vm474, %v1319, -inf
    %1328 = vmax.xlane.f32.xlu0 %v1327
    %v1329 = vpop.xlane.xlu0 %1328
    %v1330 = vsel %vm474, %v1324, -inf
    %1331 = vmax.xlane.f32.xlu0 %v1330
    %v1332 = vpop.xlane.xlu0 %1331
    %v1333 = vsub.f32 %v1319, %v1329
    %v1334 = vsub.f32 %v1324, %v1332
    %v1335 = vmul.f32 %v1333, 1.442695
    %v1336 = vpow.pop %v1335
    %v1337 = vmul.f32 %v1334, 1.442695
    %v1338 = vpow.pop %v1337
    %v1339 = vsel %vm474, %v1336, 0.0
    %1340 = vadd.xlane.f32.xlu0 %v1339
    %v1341 = vpop.xlane.xlu0 %1340
    %v1342 = vsel %vm474, %v1338, 0.0
    %1343 = vadd.xlane.f32.xlu0 %v1342
    %v1344 = vpop.xlane.xlu0 %1343
    %v1345 = vrcp.pop %v1341
    %v1346 = vrcp.pop %v1344
    %v1347 = vmul.f32 %v1336, %v1345
    %v1348 = vmul.f32 %v1338, %v1346
    %v1350 = vsel %vm474, %v1347, 0
    %v1353 = vsel %vm474, %v1348, 0
    %1355 = vmatprep.subr.mxu0 0.0
    %1356 = vmatpush1.msra.mxu0 %v1232
    %1357 = vmatprep.subr.mxu0 0.0
    %1358 = vmatpush1.msra.mxu0 %v1237
    %1359 = vmatprep.subr.mxu0 0.0
    %1360 = vmatpush1.msra.mxu0 0.0
    %1361 = vmatprep.subr.mxu0 0.0
    %1362 = vmatpush1.msra.mxu0 0.0
    %1363 = vmatprep.subr.mxu0 0.0
    %1364 = vmatpush1.msra.mxu0 0.0
    %1365 = vmatprep.subr.mxu0 0.0
    %1366 = vmatpush1.msra.mxu0 0.0
    %1367 = vmatprep.subr.mxu0 0.0
    %1368 = vmatpush1.msra.mxu0 0.0
    %1369 = vmatprep.subr.mxu0 0.0
    %1370 = vmatpush1.msra.mxu0 0.0
    %1371 = vmatprep.subr.mxu0 0.0
    %1372 = vmatpush1.msra.mxu0 0.0
    %1373 = vmatprep.subr.mxu0 0.0
    %1374 = vmatpush1.msra.mxu0 0.0
    %1375 = vmatprep.subr.mxu0 0.0
    %1376 = vmatpush1.msra.mxu0 0.0
    %1377 = vmatprep.subr.mxu0 0.0
    %1378 = vmatpush1.msra.mxu0 0.0
    %1379 = vmatprep.subr.mxu0 0.0
    %1380 = vmatpush1.msra.mxu0 0.0
    %1381 = vmatprep.subr.mxu0 0.0
    %1382 = vmatpush1.msra.mxu0 0.0
    %1383 = vmatprep.subr.mxu0 0.0
    %1384 = vmatpush1.msra.mxu0 0.0
    %1385 = vmatprep.subr.mxu0 0.0
    %1386 = vmatpush1.msra.mxu0 0.0
    %1387 = vmatprep.subr.mxu0 0.0
    %1388 = vmatpush1.msra.mxu0 0.0
    %1389 = vmatprep.subr.mxu0 0.0
    %1390 = vmatpush1.msra.mxu0 0.0
    %1391 = vmatprep.subr.mxu0 0.0
    %1392 = vmatpush1.msra.mxu0 0.0
    %1393 = vmatprep.subr.mxu0 0.0
    %1394 = vmatpush1.msra.mxu0 0.0
    %1395 = vmatprep.subr.mxu0 0.0
    %1396 = vmatpush1.msra.mxu0 0.0
    %1397 = vmatprep.subr.mxu0 0.0
    %1398 = vmatpush1.msra.mxu0 0.0
    %1399 = vmatprep.subr.mxu0 0.0
    %1400 = vmatpush1.msra.mxu0 0.0
    %1401 = vmatprep.subr.mxu0 0.0
    %1402 = vmatpush1.msra.mxu0 0.0
    %1403 = vmatprep.subr.mxu0 0.0
    %1404 = vmatpush1.msra.mxu0 0.0
    %1405 = vmatprep.subr.mxu0 0.0
    %1406 = vmatpush1.msra.mxu0 0.0
    %1407 = vmatprep.subr.mxu0 0.0
    %1408 = vmatpush1.msra.mxu0 0.0
    %1409 = vmatprep.subr.mxu0 0.0
    %1410 = vmatpush1.msra.mxu0 0.0
    %1411 = vmatprep.subr.mxu0 0.0
    %1412 = vmatpush1.msra.mxu0 0.0
    %1413 = vmatprep.subr.mxu0 0.0
    %1414 = vmatpush1.msra.mxu0 0.0
    %1415 = vmatprep.subr.mxu0 0.0
    %1416 = vmatpush1.msra.mxu0 0.0
    %1417 = vmatprep.subr.mxu0 0.0
    %1418 = vmatpush1.msra.mxu0 0.0
    %1419 = vmatprep.mubr.f32.mxu0 0.0
    %1420 = vmatmul.mubr.f32.gmra.mrb[0].mxu0 %v1350
    %v1421 = vpop.f32.mrb[0].mxu0
    %v1422 = vadd.f32 0.0, %v1421
    %v1423 = vpop.f32.mrb[0].mxu0
    %1424 = vmatprep.mubr.f32.mxu0 0.0
    %1425 = vmatmul.mubr.f32.gmra.mrb[0].mxu0 %v1353
    %v1426 = vpop.f32.mrb[0].mxu0
    %v1427 = vadd.f32 0.0, %v1426
    %v1428 = vpop.f32.mrb[0].mxu0
    %1429 = vdwg.mxu0
    %s1430 = scalar_lea.vmem [#allocation7], 32
    %v1431 = vld [vmem:[%s1430] sm:$0xff]
    %v1432 = vld [vmem:[%s1430 + $0x8] sm:$0xff]
    %v1433 = vld [vmem:[%s1430 + $0x10] sm:$0xff]
    %v1434 = vld [vmem:[%s1430 + $0x18] sm:$0xff]
    %s1435 = scalar_lea.vmem %s10, 1
    %v1436 = vld [vmem:[%s1435] sm:$0x1]
    %v1438 = vlaneseq
    %v1439 = vshrl.u32 %v1438, 7
    %v1440 = vsub.s32 0, %v1439
    %v1441 = vrot.slane %v1436, %v1440
    %v1444 = vsel %vm133, %v1422, 0
    %v1447 = vsel %vm133, %v1427, 0
    %1449 = vmatprep.subr.mxu0 0.0
    %1450 = vmatpush1.msra.mxu0 %v1431
    %1451 = vmatprep.subr.mxu0 0.0
    %1452 = vmatpush1.msra.mxu0 %v1432
    %1453 = vmatprep.subr.mxu0 0.0
    %1454 = vmatpush1.msra.mxu0 %v1433
    %1455 = vmatprep.subr.mxu0 0.0
    %1456 = vmatpush1.msra.mxu0 %v1434
    %1457 = vmatprep.subr.mxu0 0.0
    %1458 = vmatpush1.msra.mxu0 0.0
    %1459 = vmatprep.subr.mxu0 0.0
    %1460 = vmatpush1.msra.mxu0 0.0
    %1461 = vmatprep.subr.mxu0 0.0
    %1462 = vmatpush1.msra.mxu0 0.0
    %1463 = vmatprep.subr.mxu0 0.0
    %1464 = vmatpush1.msra.mxu0 0.0
    %1465 = vmatprep.subr.mxu0 0.0
    %1466 = vmatpush1.msra.mxu0 0.0
    %1467 = vmatprep.subr.mxu0 0.0
    %1468 = vmatpush1.msra.mxu0 0.0
    %1469 = vmatprep.subr.mxu0 0.0
    %1470 = vmatpush1.msra.mxu0 0.0
    %1471 = vmatprep.subr.mxu0 0.0
    %1472 = vmatpush1.msra.mxu0 0.0
    %1473 = vmatprep.subr.mxu0 0.0
    %1474 = vmatpush1.msra.mxu0 0.0
    %1475 = vmatprep.subr.mxu0 0.0
    %1476 = vmatpush1.msra.mxu0 0.0
    %1477 = vmatprep.subr.mxu0 0.0
    %1478 = vmatpush1.msra.mxu0 0.0
    %1479 = vmatprep.subr.mxu0 0.0
    %1480 = vmatpush1.msra.mxu0 0.0
    %1481 = vmatprep.subr.mxu0 0.0
    %1482 = vmatpush1.msra.mxu0 0.0
    %1483 = vmatprep.subr.mxu0 0.0
    %1484 = vmatpush1.msra.mxu0 0.0
    %1485 = vmatprep.subr.mxu0 0.0
    %1486 = vmatpush1.msra.mxu0 0.0
    %1487 = vmatprep.subr.mxu0 0.0
    %1488 = vmatpush1.msra.mxu0 0.0
    %1489 = vmatprep.subr.mxu0 0.0
    %1490 = vmatpush1.msra.mxu0 0.0
    %1491 = vmatprep.subr.mxu0 0.0
    %1492 = vmatpush1.msra.mxu0 0.0
    %1493 = vmatprep.subr.mxu0 0.0
    %1494 = vmatpush1.msra.mxu0 0.0
    %1495 = vmatprep.subr.mxu0 0.0
    %1496 = vmatpush1.msra.mxu0 0.0
    %1497 = vmatprep.subr.mxu0 0.0
    %1498 = vmatpush1.msra.mxu0 0.0
    %1499 = vmatprep.subr.mxu0 0.0
    %1500 = vmatpush1.msra.mxu0 0.0
    %1501 = vmatprep.subr.mxu0 0.0
    %1502 = vmatpush1.msra.mxu0 0.0
    %1503 = vmatprep.subr.mxu0 0.0
    %1504 = vmatpush1.msra.mxu0 0.0
    %1505 = vmatprep.subr.mxu0 0.0
    %1506 = vmatpush1.msra.mxu0 0.0
    %1507 = vmatprep.subr.mxu0 0.0
    %1508 = vmatpush1.msra.mxu0 0.0
    %1509 = vmatprep.subr.mxu0 0.0
    %1510 = vmatpush1.msra.mxu0 0.0
    %1511 = vmatprep.subr.mxu0 0.0
    %1512 = vmatpush1.msra.mxu0 0.0
    %1513 = vmatprep.mubr.f32.mxu0 0.0
    %1514 = vmatmul.mubr.f32.gmra.mrb[0].mxu0 %v1444
    %v1515 = vpop.f32.mrb[0].mxu0
    %v1516 = vadd.f32 %v1441, %v1515
    %v1517 = vpop.f32.mrb[0].mxu0
    %1518 = vmatprep.mubr.f32.mxu0 0.0
    %1519 = vmatmul.mubr.f32.gmra.mrb[0].mxu0 %v1447
    %v1520 = vpop.f32.mrb[0].mxu0
    %v1521 = vadd.f32 %v1441, %v1520
    %v1522 = vpop.f32.mrb[0].mxu0
    %1523 = vdwg.mxu0
    %v1524 = vadd.f32 %v968, %v1516
    %v1525 = vadd.f32 %v969, %v1521
    %s1526 = scalar_lea.vmem %s11, 1
    %v1527 = vld [vmem:[%s1526] sm:$0x1]
    %s1528 = scalar_lea.vmem %s12, 1
    %v1529 = vld [vmem:[%s1528] sm:$0x1]
    %v1530 = vsel %vm133, %v1524, 0.0
    %1531 = vadd.xlane.f32.xlu0 %v1530
    %v1532 = vpop.xlane.xlu0 %1531
    %v1533 = vsel %vm133, %v1525, 0.0
    %1534 = vadd.xlane.f32.xlu0 %v1533
    %v1535 = vpop.xlane.xlu0 %1534
    %v1536 = vmul.f32 %v1532, %v680
    %v1537 = vmul.f32 %v1535, %v680
    %v1538 = vsub.f32 %v1524, %v1536
    %v1539 = vsub.f32 %v1525, %v1537
    %v1540 = vmul.f32 %v1538, %v1538
    %v1541 = vmul.f32 %v1539, %v1539
    %v1542 = vsel %vm133, %v1540, 0.0
    %1543 = vadd.xlane.f32.xlu0 %v1542
    %v1544 = vpop.xlane.xlu0 %1543
    %v1545 = vsel %vm133, %v1541, 0.0
    %1546 = vadd.xlane.f32.xlu0 %v1545
    %v1547 = vpop.xlane.xlu0 %1546
    %v1548 = vmul.f32 %v1544, %v680
    %v1549 = vmul.f32 %v1547, %v680
    %v1550 = vadd.f32 %v1548, 1e-12
    %v1551 = vadd.f32 %v1549, 1e-12
    %v1552 = vrsqrt.pop %v1550
    %v1553 = vrsqrt.pop %v1551
    %v1554 = vmul.f32 %v1538, %v1552
    %v1555 = vmul.f32 %v1539, %v1553
    %v1557 = vlaneseq
    %v1558 = vshrl.u32 %v1557, 7
    %v1559 = vsub.s32 0, %v1558
    %v1560 = vrot.slane %v1527, %v1559
    %v1562 = vmul.f32 %v1554, %v1560
    %v1563 = vmul.f32 %v1555, %v1560
    %v1565 = vlaneseq
    %v1566 = vshrl.u32 %v1565, 7
    %v1567 = vsub.s32 0, %v1566
    %v1568 = vrot.slane %v1529, %v1567
    %v1570 = vadd.f32 %v1562, %v1568
    %v1571 = vadd.f32 %v1563, %v1568
    %s1572 = scalar_lea.vmem [#allocation8], 32
    %v1573 = vld [vmem:[%s1572] sm:$0xff]
    %v1574 = vld [vmem:[%s1572 + $0x8] sm:$0xff]
    %v1575 = vld [vmem:[%s1572 + $0x10] sm:$0xff]
    %v1576 = vld [vmem:[%s1572 + $0x18] sm:$0xff]
    %s1577 = scalar_lea.vmem %s14, 1
    %v1578 = vld [vmem:[%s1577] sm:$0x1]
    %v1580 = vlaneseq
    %v1581 = vshrl.u32 %v1580, 7
    %v1582 = vsub.s32 0, %v1581
    %v1583 = vrot.slane %v1578, %v1582
    %v1586 = vsel %vm133, %v1570, 0
    %v1589 = vsel %vm133, %v1571, 0
    %1591 = vmatprep.subr.mxu0 0.0
    %1592 = vmatpush1.msra.mxu0 %v1573
    %1593 = vmatprep.subr.mxu0 0.0
    %1594 = vmatpush1.msra.mxu0 %v1574
    %1595 = vmatprep.subr.mxu0 0.0
    %1596 = vmatpush1.msra.mxu0 %v1575
    %1597 = vmatprep.subr.mxu0 0.0
    %1598 = vmatpush1.msra.mxu0 %v1576
    %1599 = vmatprep.subr.mxu0 0.0
    %1600 = vmatpush1.msra.mxu0 0.0
    %1601 = vmatprep.subr.mxu0 0.0
    %1602 = vmatpush1.msra.mxu0 0.0
    %1603 = vmatprep.subr.mxu0 0.0
    %1604 = vmatpush1.msra.mxu0 0.0
    %1605 = vmatprep.subr.mxu0 0.0
    %1606 = vmatpush1.msra.mxu0 0.0
    %1607 = vmatprep.subr.mxu0 0.0
    %1608 = vmatpush1.msra.mxu0 0.0
    %1609 = vmatprep.subr.mxu0 0.0
    %1610 = vmatpush1.msra.mxu0 0.0
    %1611 = vmatprep.subr.mxu0 0.0
    %1612 = vmatpush1.msra.mxu0 0.0
    %1613 = vmatprep.subr.mxu0 0.0
    %1614 = vmatpush1.msra.mxu0 0.0
    %1615 = vmatprep.subr.mxu0 0.0
    %1616 = vmatpush1.msra.mxu0 0.0
    %1617 = vmatprep.subr.mxu0 0.0
    %1618 = vmatpush1.msra.mxu0 0.0
    %1619 = vmatprep.subr.mxu0 0.0
    %1620 = vmatpush1.msra.mxu0 0.0
    %1621 = vmatprep.subr.mxu0 0.0
    %1622 = vmatpush1.msra.mxu0 0.0
    %1623 = vmatprep.subr.mxu0 0.0
    %1624 = vmatpush1.msra.mxu0 0.0
    %1625 = vmatprep.subr.mxu0 0.0
    %1626 = vmatpush1.msra.mxu0 0.0
    %1627 = vmatprep.subr.mxu0 0.0
    %1628 = vmatpush1.msra.mxu0 0.0
    %1629 = vmatprep.subr.mxu0 0.0
    %1630 = vmatpush1.msra.mxu0 0.0
    %1631 = vmatprep.subr.mxu0 0.0
    %1632 = vmatpush1.msra.mxu0 0.0
    %1633 = vmatprep.subr.mxu0 0.0
    %1634 = vmatpush1.msra.mxu0 0.0
    %1635 = vmatprep.subr.mxu0 0.0
    %1636 = vmatpush1.msra.mxu0 0.0
    %1637 = vmatprep.subr.mxu0 0.0
    %1638 = vmatpush1.msra.mxu0 0.0
    %1639 = vmatprep.subr.mxu0 0.0
    %1640 = vmatpush1.msra.mxu0 0.0
    %1641 = vmatprep.subr.mxu0 0.0
    %1642 = vmatpush1.msra.mxu0 0.0
    %1643 = vmatprep.subr.mxu0 0.0
    %1644 = vmatpush1.msra.mxu0 0.0
    %1645 = vmatprep.subr.mxu0 0.0
    %1646 = vmatpush1.msra.mxu0 0.0
    %1647 = vmatprep.subr.mxu0 0.0
    %1648 = vmatpush1.msra.mxu0 0.0
    %1649 = vmatprep.subr.mxu0 0.0
    %1650 = vmatpush1.msra.mxu0 0.0
    %1651 = vmatprep.subr.mxu0 0.0
    %1652 = vmatpush1.msra.mxu0 0.0
    %1653 = vmatprep.subr.mxu0 0.0
    %1654 = vmatpush1.msra.mxu0 0.0
    %1655 = vmatprep.mubr.f32.mxu0 0.0
    %1656 = vmatmul.mubr.f32.gmra.mrb[0].mxu0 %v1586
    %v1657 = vpop.f32.mrb[0].mxu0
    %v1658 = vadd.f32 %v1583, %v1657
    %v1659 = vpop.f32.mrb[0].mxu0
    %1660 = vmatprep.mubr.f32.mxu0 0.0
    %1661 = vmatmul.mubr.f32.gmra.mrb[0].mxu0 %v1589
    %v1662 = vpop.f32.mrb[0].mxu0
    %v1663 = vadd.f32 %v1583, %v1662
    %v1664 = vpop.f32.mrb[0].mxu0
    %1665 = vdwg.mxu0
    %v1666 = vmul.f32 %v1658, %v1658
    %v1667 = vmul.f32 %v1663, %v1663
    %v1668 = vmul.f32 %v1658, %v1666
    %v1669 = vmul.f32 %v1663, %v1667
    %v1670 = vmul.f32 %v1668, 0.044715
    %v1671 = vmul.f32 %v1669, 0.044715
    %v1672 = vadd.f32 %v1658, %v1670
    %v1673 = vadd.f32 %v1663, %v1671
    %v1674 = vmul.f32 %v1672, 0.7978846
    %v1675 = vmul.f32 %v1673, 0.7978846
    %v1676 = vtanh.pop %v1674
    %v1677 = vtanh.pop %v1675
    %v1678 = vadd.f32 %v1676, 1.0
    %v1679 = vadd.f32 %v1677, 1.0
    %v1680 = vmul.f32 %v1678, 0.5
    %v1681 = vmul.f32 %v1679, 0.5
    %v1682 = vmul.f32 %v1658, %v1680
    %v1683 = vmul.f32 %v1663, %v1681
    %s1684 = scalar_lea.vmem %s15, 64
    %v1685 = vld [vmem:[%s1684] sm:$0xff]
    %v1686 = vld [vmem:[%s1684 + $0x8] sm:$0xff]
    %v1687 = vld [vmem:[%s1684 + $0x10] sm:$0xff]
    %v1688 = vld [vmem:[%s1684 + $0x18] sm:$0xff]
    %v1689 = vld [vmem:[%s1684 + $0x20] sm:$0xff]
    %v1690 = vld [vmem:[%s1684 + $0x28] sm:$0xff]
    %v1691 = vld [vmem:[%s1684 + $0x30] sm:$0xff]
    %v1692 = vld [vmem:[%s1684 + $0x38] sm:$0xff]
    %s1693 = scalar_lea.vmem %s16, 1
    %v1694 = vld [vmem:[%s1693] sm:$0x1]
    %v1696 = vlaneseq
    %v1697 = vshrl.u32 %v1696, 7
    %v1698 = vsub.s32 0, %v1697
    %v1699 = vrot.slane %v1694, %v1698
    %v1702 = vsel %vm842, %v1682, 0
    %v1705 = vsel %vm842, %v1683, 0
    %1707 = vmatprep.subr.mxu0 0.0
    %1708 = vmatpush1.msra.mxu0 %v1685
    %1709 = vmatprep.subr.mxu0 0.0
    %1710 = vmatpush1.msra.mxu0 %v1686
    %1711 = vmatprep.subr.mxu0 0.0
    %1712 = vmatpush1.msra.mxu0 %v1687
    %1713 = vmatprep.subr.mxu0 0.0
    %1714 = vmatpush1.msra.mxu0 %v1688
    %1715 = vmatprep.subr.mxu0 0.0
    %1716 = vmatpush1.msra.mxu0 %v1689
    %1717 = vmatprep.subr.mxu0 0.0
    %1718 = vmatpush1.msra.mxu0 %v1690
    %1719 = vmatprep.subr.mxu0 0.0
    %1720 = vmatpush1.msra.mxu0 %v1691
    %1721 = vmatprep.subr.mxu0 0.0
    %1722 = vmatpush1.msra.mxu0 %v1692
    %1723 = vmatprep.subr.mxu0 0.0
    %1724 = vmatpush1.msra.mxu0 0.0
    %1725 = vmatprep.subr.mxu0 0.0
    %1726 = vmatpush1.msra.mxu0 0.0
    %1727 = vmatprep.subr.mxu0 0.0
    %1728 = vmatpush1.msra.mxu0 0.0
    %1729 = vmatprep.subr.mxu0 0.0
    %1730 = vmatpush1.msra.mxu0 0.0
    %1731 = vmatprep.subr.mxu0 0.0
    %1732 = vmatpush1.msra.mxu0 0.0
    %1733 = vmatprep.subr.mxu0 0.0
    %1734 = vmatpush1.msra.mxu0 0.0
    %1735 = vmatprep.subr.mxu0 0.0
    %1736 = vmatpush1.msra.mxu0 0.0
    %1737 = vmatprep.subr.mxu0 0.0
    %1738 = vmatpush1.msra.mxu0 0.0
    %1739 = vmatprep.subr.mxu0 0.0
    %1740 = vmatpush1.msra.mxu0 0.0
    %1741 = vmatprep.subr.mxu0 0.0
    %1742 = vmatpush1.msra.mxu0 0.0
    %1743 = vmatprep.subr.mxu0 0.0
    %1744 = vmatpush1.msra.mxu0 0.0
    %1745 = vmatprep.subr.mxu0 0.0
    %1746 = vmatpush1.msra.mxu0 0.0
    %1747 = vmatprep.subr.mxu0 0.0
    %1748 = vmatpush1.msra.mxu0 0.0
    %1749 = vmatprep.subr.mxu0 0.0
    %1750 = vmatpush1.msra.mxu0 0.0
    %1751 = vmatprep.subr.mxu0 0.0
    %1752 = vmatpush1.msra.mxu0 0.0
    %1753 = vmatprep.subr.mxu0 0.0
    %1754 = vmatpush1.msra.mxu0 0.0
    %1755 = vmatprep.subr.mxu0 0.0
    %1756 = vmatpush1.msra.mxu0 0.0
    %1757 = vmatprep.subr.mxu0 0.0
    %1758 = vmatpush1.msra.mxu0 0.0
    %1759 = vmatprep.subr.mxu0 0.0
    %1760 = vmatpush1.msra.mxu0 0.0
    %1761 = vmatprep.subr.mxu0 0.0
    %1762 = vmatpush1.msra.mxu0 0.0
    %1763 = vmatprep.subr.mxu0 0.0
    %1764 = vmatpush1.msra.mxu0 0.0
    %1765 = vmatprep.subr.mxu0 0.0
    %1766 = vmatpush1.msra.mxu0 0.0
    %1767 = vmatprep.subr.mxu0 0.0
    %1768 = vmatpush1.msra.mxu0 0.0
    %1769 = vmatprep.subr.mxu0 0.0
    %1770 = vmatpush1.msra.mxu0 0.0
    %1771 = vmatprep.mubr.f32.mxu0 0.0
    %1772 = vmatmul.mubr.f32.gmra.mrb[0].mxu0 %v1702
    %v1773 = vpop.f32.mrb[0].mxu0
    %v1774 = vadd.f32 %v1699, %v1773
    %v1775 = vpop.f32.mrb[0].mxu0
    %1776 = vmatprep.mubr.f32.mxu0 0.0
    %1777 = vmatmul.mubr.f32.gmra.mrb[0].mxu0 %v1705
    %v1778 = vpop.f32.mrb[0].mxu0
    %v1779 = vadd.f32 %v1699, %v1778
    %v1780 = vpop.f32.mrb[0].mxu0
    %1781 = vdwg.mxu0
    %v1782 = vadd.f32 %v1570, %v1774
    %v1783 = vadd.f32 %v1571, %v1779
    %s1784 = scalar_lea.vmem %s17, 1
    %v1785 = vld [vmem:[%s1784] sm:$0x1]
    %s1786 = scalar_lea.vmem %s18, 1
    %v1787 = vld [vmem:[%s1786] sm:$0x1]
    %v1788 = vsel %vm133, %v1782, 0.0
    %1789 = vadd.xlane.f32.xlu0 %v1788
    %v1790 = vpop.xlane.xlu0 %1789
    %v1791 = vsel %vm133, %v1783, 0.0
    %1792 = vadd.xlane.f32.xlu0 %v1791
    %v1793 = vpop.xlane.xlu0 %1792
    %v1794 = vmul.f32 %v1790, %v680
    %v1795 = vmul.f32 %v1793, %v680
    %v1796 = vsub.f32 %v1782, %v1794
    %v1797 = vsub.f32 %v1783, %v1795
    %v1798 = vmul.f32 %v1796, %v1796
    %v1799 = vmul.f32 %v1797, %v1797
    %v1800 = vsel %vm133, %v1798, 0.0
    %1801 = vadd.xlane.f32.xlu0 %v1800
    %v1802 = vpop.xlane.xlu0 %1801
    %v1803 = vsel %vm133, %v1799, 0.0
    %1804 = vadd.xlane.f32.xlu0 %v1803
    %v1805 = vpop.xlane.xlu0 %1804
    %v1806 = vmul.f32 %v1802, %v680
    %v1807 = vmul.f32 %v1805, %v680
    %v1808 = vadd.f32 %v1806, 1e-12
    %v1809 = vadd.f32 %v1807, 1e-12
    %v1810 = vrsqrt.pop %v1808
    %v1811 = vrsqrt.pop %v1809
    %v1812 = vmul.f32 %v1796, %v1810
    %v1813 = vmul.f32 %v1797, %v1811
    %v1815 = vlaneseq
    %v1816 = vshrl.u32 %v1815, 7
    %v1817 = vsub.s32 0, %v1816
    %v1818 = vrot.slane %v1785, %v1817
    %v1820 = vmul.f32 %v1812, %v1818
    %v1821 = vmul.f32 %v1813, %v1818
    %v1823 = vlaneseq
    %v1824 = vshrl.u32 %v1823, 7
    %v1825 = vsub.s32 0, %v1824
    %v1826 = vrot.slane %v1787, %v1825
    %v1828 = vadd.f32 %v1820, %v1826
    %v1829 = vadd.f32 %v1821, %v1826
    %v1830 = vld [vmem:[%s2] sm:$0x3]
    %s1831 = scalar_lea.vmem %s2, 2
    %v1832 = vld [vmem:[%s1831] sm:$0x3]
    %v1834 = vsel %vm474, %v1830, 0
    %1836 = vmatprep.subr.mxu0 0.0
    %1837 = vmatpush1.msra.mxu0 %v1828
    %1838 = vmatprep.subr.mxu0 0.0
    %1839 = vmatpush1.msra.mxu0 %v1829
    %1840 = vmatprep.subr.mxu0 0.0
    %1841 = vmatpush1.msra.mxu0 0.0
    %1842 = vmatprep.subr.mxu0 0.0
    %1843 = vmatpush1.msra.mxu0 0.0
    %1844 = vmatprep.subr.mxu0 0.0
    %1845 = vmatpush1.msra.mxu0 0.0
    %1846 = vmatprep.subr.mxu0 0.0
    %1847 = vmatpush1.msra.mxu0 0.0
    %1848 = vmatprep.subr.mxu0 0.0
    %1849 = vmatpush1.msra.mxu0 0.0
    %1850 = vmatprep.subr.mxu0 0.0
    %1851 = vmatpush1.msra.mxu0 0.0
    %1852 = vmatprep.subr.mxu0 0.0
    %1853 = vmatpush1.msra.mxu0 0.0
    %1854 = vmatprep.subr.mxu0 0.0
    %1855 = vmatpush1.msra.mxu0 0.0
    %1856 = vmatprep.subr.mxu0 0.0
    %1857 = vmatpush1.msra.mxu0 0.0
    %1858 = vmatprep.subr.mxu0 0.0
    %1859 = vmatpush1.msra.mxu0 0.0
    %1860 = vmatprep.subr.mxu0 0.0
    %1861 = vmatpush1.msra.mxu0 0.0
    %1862 = vmatprep.subr.mxu0 0.0
    %1863 = vmatpush1.msra.mxu0 0.0
    %1864 = vmatprep.subr.mxu0 0.0
    %1865 = vmatpush1.msra.mxu0 0.0
    %1866 = vmatprep.subr.mxu0 0.0
    %1867 = vmatpush1.msra.mxu0 0.0
    %1868 = vmatprep.subr.mxu0 0.0
    %1869 = vmatpush1.msra.mxu0 0.0
    %1870 = vmatprep.subr.mxu0 0.0
    %1871 = vmatpush1.msra.mxu0 0.0
    %1872 = vmatprep.subr.mxu0 0.0
    %1873 = vmatpush1.msra.mxu0 0.0
    %1874 = vmatprep.subr.mxu0 0.0
    %1875 = vmatpush1.msra.mxu0 0.0
    %1876 = vmatprep.subr.mxu0 0.0
    %1877 = vmatpush1.msra.mxu0 0.0
    %1878 = vmatprep.subr.mxu0 0.0
    %1879 = vmatpush1.msra.mxu0 0.0
    %1880 = vmatprep.subr.mxu0 0.0
    %1881 = vmatpush1.msra.mxu0 0.0
    %1882 = vmatprep.subr.mxu0 0.0
    %1883 = vmatpush1.msra.mxu0 0.0
    %1884 = vmatprep.subr.mxu0 0.0
    %1885 = vmatpush1.msra.mxu0 0.0
    %1886 = vmatprep.subr.mxu0 0.0
    %1887 = vmatpush1.msra.mxu0 0.0
    %1888 = vmatprep.subr.mxu0 0.0
    %1889 = vmatpush1.msra.mxu0 0.0
    %1890 = vmatprep.subr.mxu0 0.0
    %1891 = vmatpush1.msra.mxu0 0.0
    %1892 = vmatprep.subr.mxu0 0.0
    %1893 = vmatpush1.msra.mxu0 0.0
    %1894 = vmatprep.subr.mxu0 0.0
    %1895 = vmatpush1.msra.mxu0 0.0
    %1896 = vmatprep.subr.mxu0 0.0
    %1897 = vmatpush1.msra.mxu0 0.0
    %1898 = vmatprep.subr.mxu0 0.0
    %1899 = vmatpush1.msra.mxu0 0.0
    %1900 = vmatprep.mubr.f32.mxu0 0.0
    %1901 = vmatmul.mubr.f32.gmra.mrb[0].mxu0 %v1834
    %v1902 = vpop.f32.mrb[0].mxu0
    %v1903 = vadd.f32 0.0, %v1902
    %v1904 = vpop.f32.mrb[0].mxu0
    %1905 = vdwg.mxu0
    %vm1906 = vcmask 123904
    %v1907 = vsel %vm1906, %v1832, 0.0
    %1908 = vadd.xlane.f32.xlu0 %v1907
    %v1909 = vpop.xlane.xlu0 %1908
    %v1910 = vmax.f32 %v1909, 1e-09
    %v1911 = vrcp.pop %v1910
    %v1912 = vmul.f32 %v1903, %v1911
    %vm1913 = vcmask 254976
    %1914 = vst.msk [vmem:[#allocation10] sm:$0x3] %vm1913, %v1912
    // Predicated region
    $region94: #{tpu_custom_call.1} parent=1 // pred_check
      _
    $region95: #{tpu_custom_call.1} parent=1 // pred_check_branch
      %1916 = sbr.rel (0) target = $region97
    $region96: #{tpu_custom_call.1} parent=1 // pred_region
      %s1918 = ssub.s32 32, 32
      %1919 = vsyncadd [#allocation4], %s1918
      %s1921 = sshll.u32 [#allocation10], 4
      %s1922 = int_to_ptr.vmem [resolvable:$true] %s1921
      %1924 = dma.vmem_to_hbm [thread:$0]  %s1922, 32, %s19, [#allocation4]
    $region97: #{tpu_custom_call.1} parent=1 // pred_fallthru
      _
    // Predicated region
    $region98: #{tpu_custom_call.1} parent=1 // pred_check
      _
    $region99: #{tpu_custom_call.1} parent=1 // pred_check_branch
      %1926 = sbr.rel (0) target = $region101
    $region100: #{tpu_custom_call.1} parent=1 // pred_region
      %1927 = dma.done [#allocation4], 32
    $region101: #{tpu_custom_call.1} parent=1 // pred_fallthru
      _
    %1928 = vsyncpa [#allocation3], 1
    %1929 = vsyncpa [#allocation6], 1
    %1930 = vsyncpa [#allocation9], 1
    %1931 = vsyncpa [#allocation4], 1

</llo_original>
